<compile_context>
chip_gen: v6e
topology: v6e:2x2x1
jax: 0.10.0
libtpu: 0.0.40
codegen_flags: <defaults>
</compile_context>

<pallas_src>
import functools

import jax
import jax.numpy as jnp
from jax.experimental import pallas as pl
from jax.experimental.pallas import tpu as pltpu

C_PAD = 8        # padded input-channel count (zero rows in W1 contribute nothing)
OUT_PAD = 128    # lane-dense output slab width (>= output_dim**2)


def _round_up(v, m):
    return (v + m - 1) // m * m


def tnet_kernel(x_ref,
                w1_ref, b1_ref, w2_ref, b2_ref, w3_ref, b3_ref,
                fw1_ref, fb1_ref, fw2_ref, fb2_ref, fw3_ref, fb3_ref,
                out_ref, acc_ref, *, npts, tile_n):
    t = pl.program_id(1)
    n_tiles = pl.num_programs(1)

    # init running-max accumulator for this batch element
    @pl.when(t == 0)
    def _():
        acc_ref[...] = jnp.zeros_like(acc_ref)

    # ---- streaming shared MLP 1/2/3 (Conv1d k=1 + folded BN + ReLU) ----
    x = x_ref[0].astype(jnp.bfloat16)                               # (tile_n, C_PAD)
    h = jnp.dot(x, w1_ref[...], preferred_element_type=jnp.float32) + b1_ref[...]
    h = jnp.maximum(h, 0.0)
    h = jnp.dot(h.astype(jnp.bfloat16), w2_ref[...],
                preferred_element_type=jnp.float32) + b2_ref[...]
    h = jnp.maximum(h, 0.0)
    h = jnp.dot(h.astype(jnp.bfloat16), w3_ref[...],
                preferred_element_type=jnp.float32) + b3_ref[...]
    h = jnp.maximum(h, 0.0)                                         # (tile_n, 256), f32, >=0

    # mask padded point rows (partial last tile), then fold into the running max
    row = t * tile_n + jax.lax.broadcasted_iota(jnp.int32, (tile_n, 1), 0)
    h = jnp.where(row < npts, h, 0.0)
    acc_ref[...] = jnp.maximum(acc_ref[...], jnp.max(h, axis=0, keepdims=True))

    # ---- FC epilogue, once per batch element, on the pooled (1, 256) feature ----
    @pl.when(t == n_tiles - 1)
    def _():
        g = acc_ref[...]                                            # (1, 256) f32
        g = jnp.maximum(
            jnp.dot(g.astype(jnp.bfloat16), fw1_ref[...],
                    preferred_element_type=jnp.float32) + fb1_ref[...], 0.0)
        g = jnp.maximum(
            jnp.dot(g.astype(jnp.bfloat16), fw2_ref[...],
                    preferred_element_type=jnp.float32) + fb2_ref[...], 0.0)
        out_ref[0] = jnp.dot(g.astype(jnp.bfloat16), fw3_ref[...],
                             preferred_element_type=jnp.float32) + fb3_ref[...]


def _prep_params(params, output_dim):
    """Pad W1 rows to C_PAD, pad fc3 cols to OUT_PAD, cast weights to bf16."""
    w1, b1, w2, b2, w3, b3, fw1, fb1, fw2, fb2, fw3, fb3 = params
    out2 = output_dim * output_dim
    w1p = jnp.pad(w1, ((0, C_PAD - w1.shape[0]), (0, 0)))
    fw3p = jnp.pad(fw3, ((0, 0), (0, OUT_PAD - out2)))
    fb3p = jnp.pad(fb3, ((0, OUT_PAD - out2),))

    wcast = lambda w: w.astype(jnp.bfloat16)
    bcast = lambda b: b.reshape(1, -1).astype(jnp.float32)
    return (wcast(w1p), bcast(b1), wcast(w2), bcast(b2), wcast(w3), bcast(b3),
            wcast(fw1), bcast(fb1), wcast(fw2), bcast(fb2), wcast(fw3p), bcast(fb3p))


def tnet_forward(x, params, output_dim=3, tile_n=1024):
    """x: (B, N, C_in) float32.  Returns (B, output_dim, output_dim)."""
    B, N, c_in = x.shape
    tile_n = max(8, min(_round_up(tile_n, 8), _round_up(N, 8)))
    n_pad = _round_up(N, tile_n)
    n_tiles = n_pad // tile_n

    xp = jnp.pad(x.astype(jnp.float32),
                 ((0, 0), (0, n_pad - N), (0, C_PAD - c_in)))
    prepped = _prep_params(params, output_dim)

    kernel = functools.partial(tnet_kernel, npts=N, tile_n=tile_n)
    const_map = lambda b, t: (0, 0)
    weight_specs = [pl.BlockSpec(p.shape, const_map) for p in prepped]

    flops = (2 * B * n_pad * (C_PAD * 64 + 64 * 128 + 128 * 256)
             + 2 * B * (256 * 256 + 256 * 128 + 128 * OUT_PAD))
    bytes_accessed = int(xp.size * 4
                         + sum(int(p.size) * p.dtype.itemsize for p in prepped)
                         + B * OUT_PAD * 4)

    out = pl.pallas_call(
        kernel,
        out_shape=jax.ShapeDtypeStruct((B, 1, OUT_PAD), jnp.float32),
        grid_spec=pltpu.PrefetchScalarGridSpec(
            num_scalar_prefetch=0,
            grid=(B, n_tiles),
            in_specs=[pl.BlockSpec((1, tile_n, C_PAD), lambda b, t: (b, t, 0))]
                     + weight_specs,
            out_specs=pl.BlockSpec((1, 1, OUT_PAD), lambda b, t: (b, 0, 0)),
            scratch_shapes=[pltpu.VMEM((1, 256), jnp.float32)]),
        compiler_params=pltpu.CompilerParams(
            dimension_semantics=("parallel", "arbitrary"),
            vmem_limit_bytes=32 * 1024 * 1024),
        cost_estimate=pl.CostEstimate(flops=flops, transcendentals=0,
                                      bytes_accessed=bytes_accessed),
    )(xp, *prepped)

    out = out.reshape(B, OUT_PAD)[:, :output_dim * output_dim]
    iden = jnp.eye(output_dim, dtype=out.dtype)
    return out.reshape(B, output_dim, output_dim) + iden


# ---------------- parameter construction (deterministic, synthetic) -------------

def _fold_bn(w, b, gamma, beta, mean, var, eps=1e-5):
    s = gamma / jnp.sqrt(var + eps)
    return w * s[None, :], b * s + beta - mean * s


def init_params(key, input_dim=3, output_dim=3):
    keys = iter(jax.random.split(key, 32))

    def dense(cin, cout):
        w = 0.1 * jax.random.normal(next(keys), (cin, cout), jnp.float32)
        b = 0.1 * jax.random.normal(next(keys), (cout,), jnp.float32)
        return w, b

    def bn(c):
        gamma = 1.0 + 0.1 * jax.random.normal(next(keys), (c,), jnp.float32)
        beta = 0.1 * jax.random.normal(next(keys), (c,), jnp.float32)
        mean = 0.1 * jax.random.normal(next(keys), (c,), jnp.float32)
        var = jnp.abs(jax.random.normal(next(keys), (c,), jnp.float32)) + 0.5
        return gamma, beta, mean, var

    layer_dims = [(input_dim, 64), (64, 128), (128, 256), (256, 256), (256, 128)]
    params = []
    for cin, cout in layer_dims:
        w, b = dense(cin, cout)
        w, b = _fold_bn(w, b, *bn(cout))          # fold BN *before* any padding
        params += [w, b]
    w, b = dense(128, output_dim * output_dim)    # fc3 (no BN)
    params += [w, b]
    return tuple(params)


# ---------------- pure-JAX reference (mirrors the kernel's bf16 matmuls) --------

def tnet_ref(x, params, output_dim=3):
    w1, b1, w2, b2, w3, b3, fw1, fb1, fw2, fb2, fw3, fb3 = params

    def mm(a, w):
        return jnp.dot(a.astype(jnp.bfloat16), w.astype(jnp.bfloat16),
                       preferred_element_type=jnp.float32)

    h = jnp.maximum(mm(x, w1) + b1, 0.0)
    h = jnp.maximum(mm(h, w2) + b2, 0.0)
    h = jnp.maximum(mm(h, w3) + b3, 0.0)
    g = jnp.max(h, axis=1)
    g = jnp.maximum(mm(g, fw1) + fb1, 0.0)
    g = jnp.maximum(mm(g, fw2) + fb2, 0.0)
    g = mm(g, fw3) + fb3
    return g.reshape(-1, output_dim, output_dim) + jnp.eye(output_dim, dtype=g.dtype)


if __name__ == "__main__":
    key = jax.random.PRNGKey(0)
    kx, kx2, kp = jax.random.split(key, 3)

    B, N, input_dim, output_dim = 2, 16, 3, 3
    params = init_params(kp, input_dim=input_dim, output_dim=output_dim)

    # single-tile case
    x = jax.random.normal(kx, (B, N, input_dim), jnp.float32)
    out = jax.block_until_ready(tnet_forward(x, params, output_dim=output_dim))
    ref = tnet_ref(x, params, output_dim=output_dim)
    assert out.shape == (B, output_dim, output_dim)
    assert jnp.allclose(out, ref, atol=2e-2, rtol=2e-2)

    # multi-tile case with a partial (masked) last tile: N=40, tile_n=16 -> 3 tiles
    x2 = jax.random.normal(kx2, (B, 40, input_dim), jnp.float32)
    out2 = jax.block_until_ready(tnet_forward(x2, params, output_dim=output_dim, tile_n=16))
    ref2 = tnet_ref(x2, params, output_dim=output_dim)
    assert out2.shape == (B, output_dim, output_dim)
    assert jnp.allclose(out2, ref2, atol=2e-2, rtol=2e-2)

    print("KERNEL_OK")
</pallas_src>

<mosaic_0001>
module attributes {stable_mosaic.version = 11 : i64} {
  func.func @tnet_kernel(%arg0: i32, %arg1: i32, %arg2: memref<1x16x8xf32, #tpu.memory_space<vmem>>, %arg3: memref<8x64xbf16, #tpu.memory_space<vmem>>, %arg4: memref<1x64xf32, #tpu.memory_space<vmem>>, %arg5: memref<64x128xbf16, #tpu.memory_space<vmem>>, %arg6: memref<1x128xf32, #tpu.memory_space<vmem>>, %arg7: memref<128x256xbf16, #tpu.memory_space<vmem>>, %arg8: memref<1x256xf32, #tpu.memory_space<vmem>>, %arg9: memref<256x256xbf16, #tpu.memory_space<vmem>>, %arg10: memref<1x256xf32, #tpu.memory_space<vmem>>, %arg11: memref<256x128xbf16, #tpu.memory_space<vmem>>, %arg12: memref<1x128xf32, #tpu.memory_space<vmem>>, %arg13: memref<128x128xbf16, #tpu.memory_space<vmem>>, %arg14: memref<1x128xf32, #tpu.memory_space<vmem>>, %arg15: memref<1x1x128xf32, #tpu.memory_space<vmem>>, %arg16: memref<1x256xf32, #tpu.memory_space<vmem>>) attributes {dimension_semantics = [#tpu.dimension_semantics<parallel>, #tpu.dimension_semantics<arbitrary>], iteration_bounds = array<i64: 2, 1>, scalar_prefetch = 0 : i64, scratch_operands = 1 : i64, tpu.core_type = #tpu.core_type<tc>, window_params = [{transform_indices = @transform_0, window_bounds = array<i64: 1, 16, 8>}, {pipeline_mode = #tpu.pipeline_mode<synchronous>, transform_indices = @transform_1, window_bounds = array<i64: 8, 64>}, {pipeline_mode = #tpu.pipeline_mode<synchronous>, transform_indices = @transform_2, window_bounds = array<i64: 1, 64>}, {pipeline_mode = #tpu.pipeline_mode<synchronous>, transform_indices = @transform_3, window_bounds = array<i64: 64, 128>}, {pipeline_mode = #tpu.pipeline_mode<synchronous>, transform_indices = @transform_4, window_bounds = array<i64: 1, 128>}, {pipeline_mode = #tpu.pipeline_mode<synchronous>, transform_indices = @transform_5, window_bounds = array<i64: 128, 256>}, {pipeline_mode = #tpu.pipeline_mode<synchronous>, transform_indices = @transform_6, window_bounds = array<i64: 1, 256>}, {pipeline_mode = #tpu.pipeline_mode<synchronous>, transform_indices = @transform_7, window_bounds = array<i64: 256, 256>}, {pipeline_mode = #tpu.pipeline_mode<synchronous>, transform_indices = @transform_8, window_bounds = array<i64: 1, 256>}, {pipeline_mode = #tpu.pipeline_mode<synchronous>, transform_indices = @transform_9, window_bounds = array<i64: 256, 128>}, {pipeline_mode = #tpu.pipeline_mode<synchronous>, transform_indices = @transform_10, window_bounds = array<i64: 1, 128>}, {pipeline_mode = #tpu.pipeline_mode<synchronous>, transform_indices = @transform_11, window_bounds = array<i64: 128, 128>}, {pipeline_mode = #tpu.pipeline_mode<synchronous>, transform_indices = @transform_12, window_bounds = array<i64: 1, 128>}, {transform_indices = @transform_13, window_bounds = array<i64: 1, 1, 128>}]} {
    %c0_i32 = arith.constant 0 : i32
    %0 = arith.cmpi eq, %arg1, %c0_i32 : i32
    %1 = arith.extui %0 : i1 to i32
    %c0_i32_0 = arith.constant 0 : i32
    %2 = arith.cmpi ne, %1, %c0_i32_0 : i32
    scf.if %2 {
      %cst_29 = arith.constant 0.000000e+00 : f32
      %47 = vector.broadcast %cst_29 : f32 to vector<1x256xf32>
      %c0_30 = arith.constant 0 : index
      %c0_31 = arith.constant 0 : index
      %48 = vector.load %arg16[%c0_30, %c0_31] : memref<1x256xf32, #tpu.memory_space<vmem>>, vector<1x256xf32>
      tpu.vector_store %arg16[%c0_30, %c0_31], %47 {strides = array<i32>} : memref<1x256xf32, #tpu.memory_space<vmem>>, vector<1x256xf32>,
    } else {
    }
    %c0 = arith.constant 0 : index
    %c0_1 = arith.constant 0 : index
    %c0_2 = arith.constant 0 : index
    %3 = vector.load %arg2[%c0, %c0_1, %c0_2] : memref<1x16x8xf32, #tpu.memory_space<vmem>>, vector<1x16x8xf32>
    %4 = vector.shape_cast %3 : vector<1x16x8xf32> to vector<16x8xf32>
    %5 = arith.truncf %4 : vector<16x8xf32> to vector<16x8xbf16>
    %c0_3 = arith.constant 0 : index
    %c0_4 = arith.constant 0 : index
    %6 = vector.load %arg3[%c0_3, %c0_4] : memref<8x64xbf16, #tpu.memory_space<vmem>>, vector<8x64xbf16>
    %cst = arith.constant dense<0.000000e+00> : vector<16x64xf32>
    %7 = tpu.matmul %5, %6, %cst {dimension_numbers = #tpu.dot_dimension_numbers<[1], [0], [0], [1], [0, 0, 1, 1], [], []>} : vector<16x8xbf16>, vector<8x64xbf16>, vector<16x64xf32> -> vector<16x64xf32>
    %c0_5 = arith.constant 0 : index
    %c0_6 = arith.constant 0 : index
    %8 = vector.load %arg4[%c0_5, %c0_6] : memref<1x64xf32, #tpu.memory_space<vmem>>, vector<1x64xf32>
    %9 = vector.broadcast %8 : vector<1x64xf32> to vector<16x64xf32>
    %10 = arith.addf %7, %9 : vector<16x64xf32>
    %cst_7 = arith.constant 0.000000e+00 : f32
    %11 = vector.broadcast %cst_7 : f32 to vector<16x64xf32>
    %12 = arith.maximumf %10, %11 : vector<16x64xf32>
    %13 = arith.truncf %12 : vector<16x64xf32> to vector<16x64xbf16>
    %c0_8 = arith.constant 0 : index
    %c0_9 = arith.constant 0 : index
    %14 = vector.load %arg5[%c0_8, %c0_9] : memref<64x128xbf16, #tpu.memory_space<vmem>>, vector<64x128xbf16>
    %cst_10 = arith.constant dense<0.000000e+00> : vector<16x128xf32>
    %15 = tpu.matmul %13, %14, %cst_10 {dimension_numbers = #tpu.dot_dimension_numbers<[1], [0], [0], [1], [0, 0, 1, 1], [], []>} : vector<16x64xbf16>, vector<64x128xbf16>, vector<16x128xf32> -> vector<16x128xf32>
    %c0_11 = arith.constant 0 : index
    %c0_12 = arith.constant 0 : index
    %16 = vector.load %arg6[%c0_11, %c0_12] : memref<1x128xf32, #tpu.memory_space<vmem>>, vector<1x128xf32>
    %17 = vector.broadcast %16 : vector<1x128xf32> to vector<16x128xf32>
    %18 = arith.addf %15, %17 : vector<16x128xf32>
    %cst_13 = arith.constant 0.000000e+00 : f32
    %19 = vector.broadcast %cst_13 : f32 to vector<16x128xf32>
    %20 = arith.maximumf %18, %19 : vector<16x128xf32>
    %21 = arith.truncf %20 : vector<16x128xf32> to vector<16x128xbf16>
    %c0_14 = arith.constant 0 : index
    %c0_15 = arith.constant 0 : index
    %22 = vector.load %arg7[%c0_14, %c0_15] : memref<128x256xbf16, #tpu.memory_space<vmem>>, vector<128x256xbf16>
    %cst_16 = arith.constant dense<0.000000e+00> : vector<16x256xf32>
    %23 = tpu.matmul %21, %22, %cst_16 {dimension_numbers = #tpu.dot_dimension_numbers<[1], [0], [0], [1], [0, 0, 1, 1], [], []>} : vector<16x128xbf16>, vector<128x256xbf16>, vector<16x256xf32> -> vector<16x256xf32>
    %c0_17 = arith.constant 0 : index
    %c0_18 = arith.constant 0 : index
    %24 = vector.load %arg8[%c0_17, %c0_18] : memref<1x256xf32, #tpu.memory_space<vmem>>, vector<1x256xf32>
    %25 = vector.broadcast %24 : vector<1x256xf32> to vector<16x256xf32>
    %26 = arith.addf %23, %25 : vector<16x256xf32>
    %cst_19 = arith.constant 0.000000e+00 : f32
    %27 = vector.broadcast %cst_19 : f32 to vector<16x256xf32>
    %28 = arith.maximumf %26, %27 : vector<16x256xf32>
    %c16_i32 = arith.constant 16 : i32
    %29 = arith.muli %arg1, %c16_i32 : i32
    %30 = tpu.iota {dimensions = array<i32: 0>} : vector<16x1xi32>
    %31 = vector.broadcast %29 : i32 to vector<16x1xi32>
    %32 = arith.addi %31, %30 : vector<16x1xi32>
    %c16_i32_20 = arith.constant 16 : i32
    %33 = vector.broadcast %c16_i32_20 : i32 to vector<16x1xi32>
    %34 = arith.cmpi slt, %32, %33 : vector<16x1xi32>
    %cst_21 = arith.constant 0.000000e+00 : f32
    %35 = vector.shape_cast %34 : vector<16x1xi1> to vector<16x1xi1>
    %36 = vector.broadcast %35 : vector<16x1xi1> to vector<16x256xi1>
    %37 = vector.broadcast %cst_21 : f32 to vector<16x256xf32>
    %38 = arith.select %36, %28, %37 : vector<16x256xi1>, vector<16x256xf32>
    %c0_22 = arith.constant 0 : index
    %c0_23 = arith.constant 0 : index
    %39 = vector.load %arg16[%c0_22, %c0_23] : memref<1x256xf32, #tpu.memory_space<vmem>>, vector<1x256xf32>
    %cst_24 = arith.constant dense<0xFF800000> : vector<256xf32>
    %40 = vector.multi_reduction <maximumf>, %38, %cst_24 [0] : vector<16x256xf32> to vector<256xf32>
    %41 = vector.shape_cast %40 : vector<256xf32> to vector<1x256xf32>
    %42 = arith.maximumf %39, %41 : vector<1x256xf32>
    %c0_25 = arith.constant 0 : index
    %c0_26 = arith.constant 0 : index
    %43 = vector.load %arg16[%c0_25, %c0_26] : memref<1x256xf32, #tpu.memory_space<vmem>>, vector<1x256xf32>
    tpu.vector_store %arg16[%c0_25, %c0_26], %42 {strides = array<i32>} : memref<1x256xf32, #tpu.memory_space<vmem>>, vector<1x256xf32>,
    %c0_i32_27 = arith.constant 0 : i32
    %44 = arith.cmpi eq, %arg1, %c0_i32_27 : i32
    %45 = arith.extui %44 : i1 to i32
    %c0_i32_28 = arith.constant 0 : i32
    %46 = arith.cmpi ne, %45, %c0_i32_28 : i32
    scf.if %46 {
      %c0_29 = arith.constant 0 : index
      %c0_30 = arith.constant 0 : index
      %47 = vector.load %arg16[%c0_29, %c0_30] : memref<1x256xf32, #tpu.memory_space<vmem>>, vector<1x256xf32>
      %48 = arith.truncf %47 : vector<1x256xf32> to vector<1x256xbf16>
      %c0_31 = arith.constant 0 : index
      %c0_32 = arith.constant 0 : index
      %49 = vector.load %arg9[%c0_31, %c0_32] : memref<256x256xbf16, #tpu.memory_space<vmem>>, vector<256x256xbf16>
      %cst_33 = arith.constant dense<0.000000e+00> : vector<1x256xf32>
      %50 = tpu.matmul %48, %49, %cst_33 {dimension_numbers = #tpu.dot_dimension_numbers<[1], [0], [0], [1], [0, 0, 1, 1], [], []>} : vector<1x256xbf16>, vector<256x256xbf16>, vector<1x256xf32> -> vector<1x256xf32>
      %c0_34 = arith.constant 0 : index
      %c0_35 = arith.constant 0 : index
      %51 = vector.load %arg10[%c0_34, %c0_35] : memref<1x256xf32, #tpu.memory_space<vmem>>, vector<1x256xf32>
      %52 = arith.addf %50, %51 : vector<1x256xf32>
      %cst_36 = arith.constant 0.000000e+00 : f32
      %53 = vector.broadcast %cst_36 : f32 to vector<1x256xf32>
      %54 = arith.maximumf %52, %53 : vector<1x256xf32>
      %55 = arith.truncf %54 : vector<1x256xf32> to vector<1x256xbf16>
      %c0_37 = arith.constant 0 : index
      %c0_38 = arith.constant 0 : index
      %56 = vector.load %arg11[%c0_37, %c0_38] : memref<256x128xbf16, #tpu.memory_space<vmem>>, vector<256x128xbf16>
      %cst_39 = arith.constant dense<0.000000e+00> : vector<1x128xf32>
      %57 = tpu.matmul %55, %56, %cst_39 {dimension_numbers = #tpu.dot_dimension_numbers<[1], [0], [0], [1], [0, 0, 1, 1], [], []>} : vector<1x256xbf16>, vector<256x128xbf16>, vector<1x128xf32> -> vector<1x128xf32>
      %c0_40 = arith.constant 0 : index
      %c0_41 = arith.constant 0 : index
      %58 = vector.load %arg12[%c0_40, %c0_41] : memref<1x128xf32, #tpu.memory_space<vmem>>, vector<1x128xf32>
      %59 = arith.addf %57, %58 : vector<1x128xf32>
      %cst_42 = arith.constant 0.000000e+00 : f32
      %60 = vector.broadcast %cst_42 : f32 to vector<1x128xf32>
      %61 = arith.maximumf %59, %60 : vector<1x128xf32>
      %62 = arith.truncf %61 : vector<1x128xf32> to vector<1x128xbf16>
      %c0_43 = arith.constant 0 : index
      %c0_44 = arith.constant 0 : index
      %63 = vector.load %arg13[%c0_43, %c0_44] : memref<128x128xbf16, #tpu.memory_space<vmem>>, vector<128x128xbf16>
      %cst_45 = arith.constant dense<0.000000e+00> : vector<1x128xf32>
      %64 = tpu.matmul %62, %63, %cst_45 {dimension_numbers = #tpu.dot_dimension_numbers<[1], [0], [0], [1], [0, 0, 1, 1], [], []>} : vector<1x128xbf16>, vector<128x128xbf16>, vector<1x128xf32> -> vector<1x128xf32>
      %c0_46 = arith.constant 0 : index
      %c0_47 = arith.constant 0 : index
      %65 = vector.load %arg14[%c0_46, %c0_47] : memref<1x128xf32, #tpu.memory_space<vmem>>, vector<1x128xf32>
      %66 = arith.addf %64, %65 : vector<1x128xf32>
      %c0_48 = arith.constant 0 : index
      %c0_49 = arith.constant 0 : index
      %c0_50 = arith.constant 0 : index
      %67 = vector.load %arg15[%c0_48, %c0_49, %c0_50] : memref<1x1x128xf32, #tpu.memory_space<vmem>>, vector<1x1x128xf32>
      %68 = vector.shape_cast %67 : vector<1x1x128xf32> to vector<1x128xf32>
      %69 = vector.shape_cast %66 : vector<1x128xf32> to vector<1x1x128xf32>
      tpu.vector_store %arg15[%c0_48, %c0_49, %c0_50], %69 {strides = array<i32>} : memref<1x1x128xf32, #tpu.memory_space<vmem>>, vector<1x1x128xf32>,
    } else {
    }
    return
  }
  func.func @transform_0(%arg0: i32, %arg1: i32) -> (i32, i32, i32) {
    %c0_i32 = arith.constant 0 : i32
    %c0_i32_0 = arith.constant 0 : i32
    return %arg0, %arg1, %c0_i32 : i32, i32, i32
  }
  func.func @transform_1(%arg0: i32, %arg1: i32) -> (i32, i32) {
    %c0_i32 = arith.constant 0 : i32
    %c0_i32_0 = arith.constant 0 : i32
    %c0_i32_1 = arith.constant 0 : i32
    return %c0_i32, %c0_i32_0 : i32, i32
  }
  func.func @transform_2(%arg0: i32, %arg1: i32) -> (i32, i32) {
    %c0_i32 = arith.constant 0 : i32
    %c0_i32_0 = arith.constant 0 : i32
    %c0_i32_1 = arith.constant 0 : i32
    return %c0_i32, %c0_i32_0 : i32, i32
  }
  func.func @transform_3(%arg0: i32, %arg1: i32) -> (i32, i32) {
    %c0_i32 = arith.constant 0 : i32
    %c0_i32_0 = arith.constant 0 : i32
    %c0_i32_1 = arith.constant 0 : i32
    return %c0_i32, %c0_i32_0 : i32, i32
  }
  func.func @transform_4(%arg0: i32, %arg1: i32) -> (i32, i32) {
    %c0_i32 = arith.constant 0 : i32
    %c0_i32_0 = arith.constant 0 : i32
    %c0_i32_1 = arith.constant 0 : i32
    return %c0_i32, %c0_i32_0 : i32, i32
  }
  func.func @transform_5(%arg0: i32, %arg1: i32) -> (i32, i32) {
    %c0_i32 = arith.constant 0 : i32
    %c0_i32_0 = arith.constant 0 : i32
    %c0_i32_1 = arith.constant 0 : i32
    return %c0_i32, %c0_i32_0 : i32, i32
  }
  func.func @transform_6(%arg0: i32, %arg1: i32) -> (i32, i32) {
    %c0_i32 = arith.constant 0 : i32
    %c0_i32_0 = arith.constant 0 : i32
    %c0_i32_1 = arith.constant 0 : i32
    return %c0_i32, %c0_i32_0 : i32, i32
  }
  func.func @transform_7(%arg0: i32, %arg1: i32) -> (i32, i32) {
    %c0_i32 = arith.constant 0 : i32
    %c0_i32_0 = arith.constant 0 : i32
    %c0_i32_1 = arith.constant 0 : i32
    return %c0_i32, %c0_i32_0 : i32, i32
  }
  func.func @transform_8(%arg0: i32, %arg1: i32) -> (i32, i32) {
    %c0_i32 = arith.constant 0 : i32
    %c0_i32_0 = arith.constant 0 : i32
    %c0_i32_1 = arith.constant 0 : i32
    return %c0_i32, %c0_i32_0 : i32, i32
  }
  func.func @transform_9(%arg0: i32, %arg1: i32) -> (i32, i32) {
    %c0_i32 = arith.constant 0 : i32
    %c0_i32_0 = arith.constant 0 : i32
    %c0_i32_1 = arith.constant 0 : i32
    return %c0_i32, %c0_i32_0 : i32, i32
  }
  func.func @transform_10(%arg0: i32, %arg1: i32) -> (i32, i32) {
    %c0_i32 = arith.constant 0 : i32
    %c0_i32_0 = arith.constant 0 : i32
    %c0_i32_1 = arith.constant 0 : i32
    return %c0_i32, %c0_i32_0 : i32, i32
  }
  func.func @transform_11(%arg0: i32, %arg1: i32) -> (i32, i32) {
    %c0_i32 = arith.constant 0 : i32
    %c0_i32_0 = arith.constant 0 : i32
    %c0_i32_1 = arith.constant 0 : i32
    return %c0_i32, %c0_i32_0 : i32, i32
  }
  func.func @transform_12(%arg0: i32, %arg1: i32) -> (i32, i32) {
    %c0_i32 = arith.constant 0 : i32
    %c0_i32_0 = arith.constant 0 : i32
    %c0_i32_1 = arith.constant 0 : i32
    return %c0_i32, %c0_i32_0 : i32, i32
  }
  func.func @transform_13(%arg0: i32, %arg1: i32) -> (i32, i32, i32) {
    %c0_i32 = arith.constant 0 : i32
    %c0_i32_0 = arith.constant 0 : i32
    %c0_i32_1 = arith.constant 0 : i32
    return %arg0, %c0_i32, %c0_i32_0 : i32, i32, i32
  }
}

</mosaic_0001>

<llo_original>
// kernel: tpu_custom_call.1
$region0: #{tpu_custom_call.1}
  #allocation0 [shape = 'u32[]', space=smem, size = 0x4, offset = 0x4, fixed_abs, tag = 'smem constant byte address 0x4 - core index']
  #allocation1 [shape = 'u32[144,128]{1,0:T(1,128)}', space=vmem, size = 0x12000, scoped, tag = 'internal scratch']
  #allocation2 [shape = 'f32[1,256]{1,0:T(1,128)}', space=vmem, size = 0x400, scoped, tag = 'scratch operand']
  %s0 = inlined_call_operand.vmem [shape: f32[2,16,8], index: 0, kind: input, shape index: {}]
  %s1 = inlined_call_operand.vmem [shape: bf16[8,64], index: 1, kind: input, shape index: {}]
  %s2 = inlined_call_operand.hbm [shape: f32[1,64], index: 2, kind: input, shape index: {}]
  %s3 = inlined_call_operand.hbm [shape: bf16[64,128], index: 3, kind: input, shape index: {}]
  %s4 = inlined_call_operand.hbm [shape: f32[1,128], index: 4, kind: input, shape index: {}]
  %s5 = inlined_call_operand.hbm [shape: bf16[128,256], index: 5, kind: input, shape index: {}]
  %s6 = inlined_call_operand.hbm [shape: f32[1,256], index: 6, kind: input, shape index: {}]
  %s7 = inlined_call_operand.hbm [shape: bf16[256,256], index: 7, kind: input, shape index: {}]
  %s8 = inlined_call_operand.hbm [shape: f32[1,256], index: 8, kind: input, shape index: {}]
  %s9 = inlined_call_operand.hbm [shape: bf16[256,128], index: 9, kind: input, shape index: {}]
  %s10 = inlined_call_operand.hbm [shape: f32[1,128], index: 10, kind: input, shape index: {}]
  %s11 = inlined_call_operand.vmem [shape: bf16[128,128], index: 11, kind: input, shape index: {}]
  %s12 = inlined_call_operand.vmem [shape: f32[1,128], index: 12, kind: input, shape index: {}]
  %s13 = inlined_call_operand.hbm [shape: f32[2,1,128], index: 13, kind: output, shape index: {}]
  %s14 = sld [smem:[#allocation0]]
  $region129: #{tpu_custom_call.1} parent=0
    _
  %s16 = ssub.s32 1, %s14
  %s17 = scalar_select 0, %s16, %s14
  $region1: #{tpu_custom_call.1} parent=0
    #allocation3 [shape = 'u8[512]{0}', space=vmem, size = 0x400, scoped, tag = 'input window, operand 2, single buffered']
    #allocation4 [shape = 's32[2]{0}', space=sflag, size = 0x8, scoped, tag = 'scoped memory for tpu_custom_call.1']
    #allocation5 [shape = 's32[2]{0}', space=sflag, size = 0x8, scoped, tag = 'scoped memory for tpu_custom_call.1']
    #allocation6 [shape = 'u8[16384]{0}', space=vmem, size = 0x4000, scoped, tag = 'input window, operand 3, single buffered']
    #allocation7 [shape = 's32[1]{0}', space=sflag, size = 0x4, scoped, tag = 'scoped memory for tpu_custom_call.1']
    #allocation8 [shape = 'u8[512]{0}', space=vmem, size = 0x400, scoped, tag = 'input window, operand 4, single buffered']
    #allocation9 [shape = 'u8[65536]{0}', space=vmem, size = 0x10000, scoped, tag = 'input window, operand 5, single buffered']
    #allocation10 [shape = 's32[1]{0}', space=sflag, size = 0x4, scoped, tag = 'scoped memory for tpu_custom_call.1']
    #allocation11 [shape = 'u8[1024]{0}', space=vmem, size = 0x400, scoped, tag = 'input window, operand 6, single buffered']
    #allocation12 [shape = 'u8[131072]{0}', space=vmem, size = 0x20000, scoped, tag = 'input window, operand 7, single buffered']
    #allocation13 [shape = 's32[1]{0}', space=sflag, size = 0x4, scoped, tag = 'scoped memory for tpu_custom_call.1']
    #allocation14 [shape = 'u8[1024]{0}', space=vmem, size = 0x400, scoped, tag = 'input window, operand 8, single buffered']
    #allocation15 [shape = 'u8[65536]{0}', space=vmem, size = 0x10000, scoped, tag = 'input window, operand 9, single buffered']
    #allocation16 [shape = 's32[1]{0}', space=sflag, size = 0x4, scoped, tag = 'scoped memory for tpu_custom_call.1']
    #allocation17 [shape = 'u8[512]{0}', space=vmem, size = 0x400, scoped, tag = 'input window, operand 10, single buffered']
    #allocation18 [shape = 'u8[1024]{0}', space=vmem, size = 0x400, scoped, tag = 'output window, operand 0']
    %18 = vsyncpa [#allocation4], 0
    %19 = vsyncpa [#allocation7], 0
    %20 = vsyncpa [#allocation10], 0
    %21 = vsyncpa [#allocation13], 0
    %22 = vsyncpa [#allocation16], 0
    %23 = vsyncpa [#allocation5], 0
    %s24 = scalar_lea.sflag [#allocation5], 1
    %25 = vsyncpa %s24, 0
    loop: start=0, step=1, limit=4
    $region2: #{tpu_custom_call.1} parent=1 // loop_pre_header
      _
    $region3: #{tpu_custom_call.1} parent=1 // loop_header
      %s27 = sphi 0, %s31
      %p28 = scmp.ge.s32.totalorder %s27, 4
      %s34 = sphi 0, %s46
      %s35 = sphi 0, %s42
      %s36 = sphi 0, %s34
      %s37 = sphi 0, %s35
      %s38 = sphi 0, %s36
      %s39 = sphi 0, %s37
      %s51 = sphi 0, %s53
      %s54 = sphi 0, %s51
      %s55 = sphi 0, %s54
      %s71 = sphi 0, %s55
      %s75 = sphi 0, %s75
      %s77 = sphi 0, %s75
      %s78 = sphi 0, %s77
      %s92 = sphi 0, %s78
      %s96 = sphi 0, %s96
      %s98 = sphi 0, %s96
      %s99 = sphi 0, %s98
      %s113 = sphi 0, %s99
      %s117 = sphi 0, %s117
      %s119 = sphi 0, %s117
      %s120 = sphi 0, %s119
      %s134 = sphi 0, %s120
      %s138 = sphi 0, %s138
      %s140 = sphi 0, %s138
      %s141 = sphi 0, %s140
      %s155 = sphi 0, %s141
      %s159 = sphi 0, %s159
      %s161 = sphi 0, %s159
      %s162 = sphi 0, %s161
      %s176 = sphi 0, %s162
      %s180 = sphi 0, %s180
      %s182 = sphi 0, %s180
      %s183 = sphi 0, %s182
      %s197 = sphi 0, %s183
      %s201 = sphi 0, %s201
      %s203 = sphi 0, %s201
      %s204 = sphi 0, %s203
      %s218 = sphi 0, %s204
      %s222 = sphi 0, %s222
      %s224 = sphi 0, %s222
      %s225 = sphi 0, %s224
      %s239 = sphi 0, %s225
      %s243 = sphi 0, %s243
      %s245 = sphi 0, %s243
      %s246 = sphi 0, %s245
      %s260 = sphi 0, %s246
      %s264 = sphi 0, %s264
      %s266 = sphi 0, %s264
      %s267 = sphi 0, %s266
      %s281 = sphi 0, %s267
      %s285 = sphi 0, %s285
      %s287 = sphi 0, %s285
      %s288 = sphi 0, %s287
      %s302 = sphi 0, %s288
      %s306 = sphi 0, %s306
      %s308 = sphi 0, %s306
      %s309 = sphi 0, %s308
      %s323 = sphi 0, %s309
      %s329 = sphi 0, %s331
      %s332 = sphi 0, %s329
      %s333 = sphi 0, %s332
      %s349 = sphi 0, %s333
    $region4: #{tpu_custom_call.1} parent=1 // loop_header_branch
      %30 = sbr.rel (%p28) target = $region8
    $region5: #{tpu_custom_call.1} parent=1 // loop_body
      %s32 = ssub.s32 %s27, 1
      %s33 = ssub.s32 %s27, 2
      %s40 = sadd.s32 1, %s35
      %p41 = scmp.ge.s32.totalorder %s40, 1
      %s42 = scalar_select %p41, 0, %s40
      %s43 = sadd.s32 1, %s34
      %s44 = scalar_select %p41, %s43, %s34
      %p45 = scmp.ge.s32.totalorder %s44, 2
      %s46 = scalar_select %p45, 0, %s44
      %s47 = ssub.s32 %s34, %s46
      %s48 = ssub.s32 %s35, %s42
      %s49 = sor.u32 %s47, %s48
      %p50 = scmp.eq.s32.totalorder %s49, 0
      %s52 = sadd.s32 %s51, 1
      %s53 = scalar_select %p50, %s51, %s52
      %p56 = pneg %p50
      %p57 = scmp.eq.s32.totalorder %s27, 1
      %p58 = por %p56, %p57
      %p59 = scmp.ne.s32.totalorder %s51, %s54
      %p60 = scmp.eq.s32.totalorder %s27, 0
      %p61 = por %p59, %p60
      %p62 = scmp.ne.s32.totalorder %s51, %s54
      %p63 = scmp.eq.s32.totalorder %s32, 1
      %p64 = por %p62, %p63
      %p65 = scmp.ne.s32.totalorder %s54, %s55
      %p66 = scmp.eq.s32.totalorder %s32, 0
      %p67 = por %p65, %p66
      %p68 = scmp.ne.s32.totalorder %s54, %s55
      %p69 = scmp.eq.s32.totalorder %s33, 1
      %p70 = por %p68, %p69
      %p72 = scmp.ne.s32.totalorder %s55, %s71
      %p73 = scmp.eq.s32.totalorder %s33, 0
      %p74 = por %p72, %p73
      %s76 = sadd.s32 %s75, 1
      %p79 = scmp.eq.s32.totalorder %s27, 1
      %p80 = scmp.ne.s32.totalorder %s75, %s77
      %p81 = scmp.eq.s32.totalorder %s27, 0
      %p82 = por %p80, %p81
      %p83 = scmp.ne.s32.totalorder %s75, %s77
      %p84 = scmp.eq.s32.totalorder %s32, 1
      %p85 = por %p83, %p84
      %p86 = scmp.ne.s32.totalorder %s77, %s78
      %p87 = scmp.eq.s32.totalorder %s32, 0
      %p88 = por %p86, %p87
      %p89 = scmp.ne.s32.totalorder %s77, %s78
      %p90 = scmp.eq.s32.totalorder %s33, 1
      %p91 = por %p89, %p90
      %p93 = scmp.ne.s32.totalorder %s78, %s92
      %p94 = scmp.eq.s32.totalorder %s33, 0
      %p95 = por %p93, %p94
      %s97 = sadd.s32 %s96, 1
      %p100 = scmp.eq.s32.totalorder %s27, 1
      %p101 = scmp.ne.s32.totalorder %s96, %s98
      %p102 = scmp.eq.s32.totalorder %s27, 0
      %p103 = por %p101, %p102
      %p104 = scmp.ne.s32.totalorder %s96, %s98
      %p105 = scmp.eq.s32.totalorder %s32, 1
      %p106 = por %p104, %p105
      %p107 = scmp.ne.s32.totalorder %s98, %s99
      %p108 = scmp.eq.s32.totalorder %s32, 0
      %p109 = por %p107, %p108
      %p110 = scmp.ne.s32.totalorder %s98, %s99
      %p111 = scmp.eq.s32.totalorder %s33, 1
      %p112 = por %p110, %p111
      %p114 = scmp.ne.s32.totalorder %s99, %s113
      %p115 = scmp.eq.s32.totalorder %s33, 0
      %p116 = por %p114, %p115
      %s118 = sadd.s32 %s117, 1
      %p121 = scmp.eq.s32.totalorder %s27, 1
      %p122 = scmp.ne.s32.totalorder %s117, %s119
      %p123 = scmp.eq.s32.totalorder %s27, 0
      %p124 = por %p122, %p123
      %p125 = scmp.ne.s32.totalorder %s117, %s119
      %p126 = scmp.eq.s32.totalorder %s32, 1
      %p127 = por %p125, %p126
      %p128 = scmp.ne.s32.totalorder %s119, %s120
      %p129 = scmp.eq.s32.totalorder %s32, 0
      %p130 = por %p128, %p129
      %p131 = scmp.ne.s32.totalorder %s119, %s120
      %p132 = scmp.eq.s32.totalorder %s33, 1
      %p133 = por %p131, %p132
      %p135 = scmp.ne.s32.totalorder %s120, %s134
      %p136 = scmp.eq.s32.totalorder %s33, 0
      %p137 = por %p135, %p136
      %s139 = sadd.s32 %s138, 1
      %p142 = scmp.eq.s32.totalorder %s27, 1
      %p143 = scmp.ne.s32.totalorder %s138, %s140
      %p144 = scmp.eq.s32.totalorder %s27, 0
      %p145 = por %p143, %p144
      %p146 = scmp.ne.s32.totalorder %s138, %s140
      %p147 = scmp.eq.s32.totalorder %s32, 1
      %p148 = por %p146, %p147
      %p149 = scmp.ne.s32.totalorder %s140, %s141
      %p150 = scmp.eq.s32.totalorder %s32, 0
      %p151 = por %p149, %p150
      %p152 = scmp.ne.s32.totalorder %s140, %s141
      %p153 = scmp.eq.s32.totalorder %s33, 1
      %p154 = por %p152, %p153
      %p156 = scmp.ne.s32.totalorder %s141, %s155
      %p157 = scmp.eq.s32.totalorder %s33, 0
      %p158 = por %p156, %p157
      %s160 = sadd.s32 %s159, 1
      %p163 = scmp.eq.s32.totalorder %s27, 1
      %p164 = scmp.ne.s32.totalorder %s159, %s161
      %p165 = scmp.eq.s32.totalorder %s27, 0
      %p166 = por %p164, %p165
      %p167 = scmp.ne.s32.totalorder %s159, %s161
      %p168 = scmp.eq.s32.totalorder %s32, 1
      %p169 = por %p167, %p168
      %p170 = scmp.ne.s32.totalorder %s161, %s162
      %p171 = scmp.eq.s32.totalorder %s32, 0
      %p172 = por %p170, %p171
      %p173 = scmp.ne.s32.totalorder %s161, %s162
      %p174 = scmp.eq.s32.totalorder %s33, 1
      %p175 = por %p173, %p174
      %p177 = scmp.ne.s32.totalorder %s162, %s176
      %p178 = scmp.eq.s32.totalorder %s33, 0
      %p179 = por %p177, %p178
      %s181 = sadd.s32 %s180, 1
      %p184 = scmp.eq.s32.totalorder %s27, 1
      %p185 = scmp.ne.s32.totalorder %s180, %s182
      %p186 = scmp.eq.s32.totalorder %s27, 0
      %p187 = por %p185, %p186
      %p188 = scmp.ne.s32.totalorder %s180, %s182
      %p189 = scmp.eq.s32.totalorder %s32, 1
      %p190 = por %p188, %p189
      %p191 = scmp.ne.s32.totalorder %s182, %s183
      %p192 = scmp.eq.s32.totalorder %s32, 0
      %p193 = por %p191, %p192
      %p194 = scmp.ne.s32.totalorder %s182, %s183
      %p195 = scmp.eq.s32.totalorder %s33, 1
      %p196 = por %p194, %p195
      %p198 = scmp.ne.s32.totalorder %s183, %s197
      %p199 = scmp.eq.s32.totalorder %s33, 0
      %p200 = por %p198, %p199
      %s202 = sadd.s32 %s201, 1
      %p205 = scmp.eq.s32.totalorder %s27, 1
      %p206 = scmp.ne.s32.totalorder %s201, %s203
      %p207 = scmp.eq.s32.totalorder %s27, 0
      %p208 = por %p206, %p207
      %p209 = scmp.ne.s32.totalorder %s201, %s203
      %p210 = scmp.eq.s32.totalorder %s32, 1
      %p211 = por %p209, %p210
      %p212 = scmp.ne.s32.totalorder %s203, %s204
      %p213 = scmp.eq.s32.totalorder %s32, 0
      %p214 = por %p212, %p213
      %p215 = scmp.ne.s32.totalorder %s203, %s204
      %p216 = scmp.eq.s32.totalorder %s33, 1
      %p217 = por %p215, %p216
      %p219 = scmp.ne.s32.totalorder %s204, %s218
      %p220 = scmp.eq.s32.totalorder %s33, 0
      %p221 = por %p219, %p220
      %s223 = sadd.s32 %s222, 1
      %p226 = scmp.eq.s32.totalorder %s27, 1
      %p227 = scmp.ne.s32.totalorder %s222, %s224
      %p228 = scmp.eq.s32.totalorder %s27, 0
      %p229 = por %p227, %p228
      %p230 = scmp.ne.s32.totalorder %s222, %s224
      %p231 = scmp.eq.s32.totalorder %s32, 1
      %p232 = por %p230, %p231
      %p233 = scmp.ne.s32.totalorder %s224, %s225
      %p234 = scmp.eq.s32.totalorder %s32, 0
      %p235 = por %p233, %p234
      %p236 = scmp.ne.s32.totalorder %s224, %s225
      %p237 = scmp.eq.s32.totalorder %s33, 1
      %p238 = por %p236, %p237
      %p240 = scmp.ne.s32.totalorder %s225, %s239
      %p241 = scmp.eq.s32.totalorder %s33, 0
      %p242 = por %p240, %p241
      %s244 = sadd.s32 %s243, 1
      %p247 = scmp.eq.s32.totalorder %s27, 1
      %p248 = scmp.ne.s32.totalorder %s243, %s245
      %p249 = scmp.eq.s32.totalorder %s27, 0
      %p250 = por %p248, %p249
      %p251 = scmp.ne.s32.totalorder %s243, %s245
      %p252 = scmp.eq.s32.totalorder %s32, 1
      %p253 = por %p251, %p252
      %p254 = scmp.ne.s32.totalorder %s245, %s246
      %p255 = scmp.eq.s32.totalorder %s32, 0
      %p256 = por %p254, %p255
      %p257 = scmp.ne.s32.totalorder %s245, %s246
      %p258 = scmp.eq.s32.totalorder %s33, 1
      %p259 = por %p257, %p258
      %p261 = scmp.ne.s32.totalorder %s246, %s260
      %p262 = scmp.eq.s32.totalorder %s33, 0
      %p263 = por %p261, %p262
      %s265 = sadd.s32 %s264, 1
      %p268 = scmp.eq.s32.totalorder %s27, 1
      %p269 = scmp.ne.s32.totalorder %s264, %s266
      %p270 = scmp.eq.s32.totalorder %s27, 0
      %p271 = por %p269, %p270
      %p272 = scmp.ne.s32.totalorder %s264, %s266
      %p273 = scmp.eq.s32.totalorder %s32, 1
      %p274 = por %p272, %p273
      %p275 = scmp.ne.s32.totalorder %s266, %s267
      %p276 = scmp.eq.s32.totalorder %s32, 0
      %p277 = por %p275, %p276
      %p278 = scmp.ne.s32.totalorder %s266, %s267
      %p279 = scmp.eq.s32.totalorder %s33, 1
      %p280 = por %p278, %p279
      %p282 = scmp.ne.s32.totalorder %s267, %s281
      %p283 = scmp.eq.s32.totalorder %s33, 0
      %p284 = por %p282, %p283
      %s286 = sadd.s32 %s285, 1
      %p289 = scmp.eq.s32.totalorder %s27, 1
      %p290 = scmp.ne.s32.totalorder %s285, %s287
      %p291 = scmp.eq.s32.totalorder %s27, 0
      %p292 = por %p290, %p291
      %p293 = scmp.ne.s32.totalorder %s285, %s287
      %p294 = scmp.eq.s32.totalorder %s32, 1
      %p295 = por %p293, %p294
      %p296 = scmp.ne.s32.totalorder %s287, %s288
      %p297 = scmp.eq.s32.totalorder %s32, 0
      %p298 = por %p296, %p297
      %p299 = scmp.ne.s32.totalorder %s287, %s288
      %p300 = scmp.eq.s32.totalorder %s33, 1
      %p301 = por %p299, %p300
      %p303 = scmp.ne.s32.totalorder %s288, %s302
      %p304 = scmp.eq.s32.totalorder %s33, 0
      %p305 = por %p303, %p304
      %s307 = sadd.s32 %s306, 1
      %p310 = scmp.eq.s32.totalorder %s27, 1
      %p311 = scmp.ne.s32.totalorder %s306, %s308
      %p312 = scmp.eq.s32.totalorder %s27, 0
      %p313 = por %p311, %p312
      %p314 = scmp.ne.s32.totalorder %s306, %s308
      %p315 = scmp.eq.s32.totalorder %s32, 1
      %p316 = por %p314, %p315
      %p317 = scmp.ne.s32.totalorder %s308, %s309
      %p318 = scmp.eq.s32.totalorder %s32, 0
      %p319 = por %p317, %p318
      %p320 = scmp.ne.s32.totalorder %s308, %s309
      %p321 = scmp.eq.s32.totalorder %s33, 1
      %p322 = por %p320, %p321
      %p324 = scmp.ne.s32.totalorder %s309, %s323
      %p325 = scmp.eq.s32.totalorder %s33, 0
      %p326 = por %p324, %p325
      %s327 = ssub.s32 %s34, %s46
      %p328 = scmp.eq.s32.totalorder %s327, 0
      %s330 = sadd.s32 %s329, 1
      %s331 = scalar_select %p328, %s329, %s330
      %p334 = pneg %p328
      %p335 = scmp.eq.s32.totalorder %s27, 1
      %p336 = por %p334, %p335
      %p337 = scmp.ne.s32.totalorder %s329, %s332
      %p338 = scmp.eq.s32.totalorder %s27, 0
      %p339 = por %p337, %p338
      %p340 = scmp.ne.s32.totalorder %s329, %s332
      %p341 = scmp.eq.s32.totalorder %s32, 1
      %p342 = por %p340, %p341
      %p343 = scmp.ne.s32.totalorder %s332, %s333
      %p344 = scmp.eq.s32.totalorder %s32, 0
      %p345 = por %p343, %p344
      %p346 = scmp.ne.s32.totalorder %s332, %s333
      %p347 = scmp.eq.s32.totalorder %s33, 1
      %p348 = por %p346, %p347
      %p350 = scmp.ne.s32.totalorder %s333, %s349
      %p351 = scmp.eq.s32.totalorder %s33, 0
      %p352 = por %p350, %p351
      %p353 = scmp.le.s32.totalorder 1, %s27
      %p354 = scmp.lt.s32.totalorder %s27, 3
      %p355 = pnand %p353, %p354
      %p356 = pneg %p355
      // Predicated region
      $region9: #{tpu_custom_call.1} parent=5 // pred_check
        _
      $region10: #{tpu_custom_call.1} parent=5 // pred_check_branch
        %358 = sbr.rel (%p355) target = $region12
      $region11: #{tpu_custom_call.1} parent=5 // pred_region
        %s359 = ssub.s32 %s27, 1
        // Predicated region
        $region13: #{tpu_custom_call.1} parent=11 // pred_check
          %p360 = pneg %p88
        $region14: #{tpu_custom_call.1} parent=11 // pred_check_branch
          %362 = sbr.rel (%p360) target = $region16
        $region15: #{tpu_custom_call.1} parent=11 // pred_region
          _
        $region16: #{tpu_custom_call.1} parent=11 // pred_fallthru
          _
        // Predicated region
        $region17: #{tpu_custom_call.1} parent=11 // pred_check
          %p363 = pneg %p109
        $region18: #{tpu_custom_call.1} parent=11 // pred_check_branch
          %365 = sbr.rel (%p363) target = $region20
        $region19: #{tpu_custom_call.1} parent=11 // pred_region
          %s367 = ssub.s32 16, 16
          %368 = vsyncadd [#allocation4], %s367
          %s370 = sshll.u32 [#allocation3], 4
          %s371 = int_to_ptr.vmem [resolvable:$true] %s370
          %373 = dma.hbm_to_vmem [thread:$0]  %s2, 16, %s371, [#allocation4]
        $region20: #{tpu_custom_call.1} parent=11 // pred_fallthru
          _
        // Predicated region
        $region21: #{tpu_custom_call.1} parent=11 // pred_check
          %p374 = pneg %p130
        $region22: #{tpu_custom_call.1} parent=11 // pred_check_branch
          %376 = sbr.rel (%p374) target = $region24
        $region23: #{tpu_custom_call.1} parent=11 // pred_region
          %s378 = ssub.s32 512, 512
          %379 = vsyncadd [#allocation7], %s378
          %s380 = sshll.u32 [#allocation6], 4
          %s381 = int_to_ptr.vmem [resolvable:$true] %s380
          %386 = dma.hbm_to_vmem [thread:$0]  %s3, 512, %s381, [#allocation7], 64, 64, 4
        $region24: #{tpu_custom_call.1} parent=11 // pred_fallthru
          _
        // Predicated region
        $region25: #{tpu_custom_call.1} parent=11 // pred_check
          %p387 = pneg %p151
        $region26: #{tpu_custom_call.1} parent=11 // pred_check_branch
          %389 = sbr.rel (%p387) target = $region28
        $region27: #{tpu_custom_call.1} parent=11 // pred_region
          %s391 = ssub.s32 16, 16
          %392 = vsyncadd [#allocation7], %s391
          %s394 = sshll.u32 [#allocation8], 4
          %s395 = int_to_ptr.vmem [resolvable:$true] %s394
          %397 = dma.hbm_to_vmem [thread:$0]  %s4, 16, %s395, [#allocation7]
        $region28: #{tpu_custom_call.1} parent=11 // pred_fallthru
          _
        // Predicated region
        $region29: #{tpu_custom_call.1} parent=11 // pred_check
          %p398 = pneg %p172
        $region30: #{tpu_custom_call.1} parent=11 // pred_check_branch
          %400 = sbr.rel (%p398) target = $region32
        $region31: #{tpu_custom_call.1} parent=11 // pred_region
          %s402 = ssub.s32 2048, 2048
          %403 = vsyncadd [#allocation10], %s402
          %s404 = sshll.u32 [#allocation9], 4
          %s405 = int_to_ptr.vmem [resolvable:$true] %s404
          %410 = dma.hbm_to_vmem [thread:$0]  %s5, 2048, %s405, [#allocation10], 128, 128, 8
        $region32: #{tpu_custom_call.1} parent=11 // pred_fallthru
          _
        // Predicated region
        $region33: #{tpu_custom_call.1} parent=11 // pred_check
          %p411 = pneg %p193
        $region34: #{tpu_custom_call.1} parent=11 // pred_check_branch
          %413 = sbr.rel (%p411) target = $region36
        $region35: #{tpu_custom_call.1} parent=11 // pred_region
          %s415 = ssub.s32 32, 32
          %416 = vsyncadd [#allocation10], %s415
          %s418 = sshll.u32 [#allocation11], 4
          %s419 = int_to_ptr.vmem [resolvable:$true] %s418
          %421 = dma.hbm_to_vmem [thread:$0]  %s6, 32, %s419, [#allocation10]
        $region36: #{tpu_custom_call.1} parent=11 // pred_fallthru
          _
        // Predicated region
        $region37: #{tpu_custom_call.1} parent=11 // pred_check
          %p422 = pneg %p214
        $region38: #{tpu_custom_call.1} parent=11 // pred_check_branch
          %424 = sbr.rel (%p422) target = $region40
        $region39: #{tpu_custom_call.1} parent=11 // pred_region
          %s426 = ssub.s32 4096, 4096
          %427 = vsyncadd [#allocation13], %s426
          %s428 = sshll.u32 [#allocation12], 4
          %s429 = int_to_ptr.vmem [resolvable:$true] %s428
          %434 = dma.hbm_to_vmem [thread:$0]  %s7, 4096, %s429, [#allocation13], 128, 128, 8
        $region40: #{tpu_custom_call.1} parent=11 // pred_fallthru
          _
        // Predicated region
        $region41: #{tpu_custom_call.1} parent=11 // pred_check
          %p435 = pneg %p235
        $region42: #{tpu_custom_call.1} parent=11 // pred_check_branch
          %437 = sbr.rel (%p435) target = $region44
        $region43: #{tpu_custom_call.1} parent=11 // pred_region
          %s439 = ssub.s32 32, 32
          %440 = vsyncadd [#allocation13], %s439
          %s442 = sshll.u32 [#allocation14], 4
          %s443 = int_to_ptr.vmem [resolvable:$true] %s442
          %445 = dma.hbm_to_vmem [thread:$0]  %s8, 32, %s443, [#allocation13]
        $region44: #{tpu_custom_call.1} parent=11 // pred_fallthru
          _
        // Predicated region
        $region45: #{tpu_custom_call.1} parent=11 // pred_check
          %p446 = pneg %p256
        $region46: #{tpu_custom_call.1} parent=11 // pred_check_branch
          %448 = sbr.rel (%p446) target = $region48
        $region47: #{tpu_custom_call.1} parent=11 // pred_region
          %s450 = ssub.s32 2048, 2048
          %451 = vsyncadd [#allocation16], %s450
          %s452 = sshll.u32 [#allocation15], 4
          %s453 = int_to_ptr.vmem [resolvable:$true] %s452
          %458 = dma.hbm_to_vmem [thread:$0]  %s9, 2048, %s453, [#allocation16], 64, 64, 4
        $region48: #{tpu_custom_call.1} parent=11 // pred_fallthru
          _
        // Predicated region
        $region49: #{tpu_custom_call.1} parent=11 // pred_check
          %p459 = pneg %p277
        $region50: #{tpu_custom_call.1} parent=11 // pred_check_branch
          %461 = sbr.rel (%p459) target = $region52
        $region51: #{tpu_custom_call.1} parent=11 // pred_region
          %s463 = ssub.s32 16, 16
          %464 = vsyncadd [#allocation16], %s463
          %s466 = sshll.u32 [#allocation17], 4
          %s467 = int_to_ptr.vmem [resolvable:$true] %s466
          %469 = dma.hbm_to_vmem [thread:$0]  %s10, 16, %s467, [#allocation16]
        $region52: #{tpu_custom_call.1} parent=11 // pred_fallthru
          _
        // Predicated region
        $region53: #{tpu_custom_call.1} parent=11 // pred_check
          %p470 = pneg %p298
        $region54: #{tpu_custom_call.1} parent=11 // pred_check_branch
          %472 = sbr.rel (%p470) target = $region56
        $region55: #{tpu_custom_call.1} parent=11 // pred_region
          _
        $region56: #{tpu_custom_call.1} parent=11 // pred_fallthru
          _
        // Predicated region
        $region57: #{tpu_custom_call.1} parent=11 // pred_check
          %p473 = pneg %p319
        $region58: #{tpu_custom_call.1} parent=11 // pred_check_branch
          %475 = sbr.rel (%p473) target = $region60
        $region59: #{tpu_custom_call.1} parent=11 // pred_region
          _
        $region60: #{tpu_custom_call.1} parent=11 // pred_fallthru
          _
      $region12: #{tpu_custom_call.1} parent=5 // pred_fallthru
        _
      %p476 = scmp.lt.s32.totalorder %s27, 2
      // Predicated region
      $region61: #{tpu_custom_call.1} parent=5 // pred_check
        %p477 = pneg %p476
      $region62: #{tpu_custom_call.1} parent=5 // pred_check_branch
        %479 = sbr.rel (%p477) target = $region64
      $region63: #{tpu_custom_call.1} parent=5 // pred_region
        // Predicated region
        $region65: #{tpu_custom_call.1} parent=63 // pred_check
          %p480 = pneg %p61
        $region66: #{tpu_custom_call.1} parent=63 // pred_check_branch
          %482 = sbr.rel (%p480) target = $region68
        $region67: #{tpu_custom_call.1} parent=63 // pred_region
          %s483 = smul.u32 2, %s35
          %p484 = scmp.lt.s32.totalorder %s34, 1
          %s485 = scalar_select %p484, %s34, 1
          %p486 = scmp.lt.s32.totalorder %s483, 1
          %s487 = scalar_select %p486, %s483, 1
          %s488 = smul.addr %s485, 2
          %s489 = sadd.s32 %s487, %s488
          %s490 = smul.addr %s489, 8
          %s491 = scalar_lea.vmem %s0, %s490
          %s492 = smul.u32 2, %s35
        $region68: #{tpu_custom_call.1} parent=63 // pred_fallthru
          _
      $region64: #{tpu_custom_call.1} parent=5 // pred_fallthru
        _
      %p493 = scmp.le.s32.totalorder 1, %s27
      %p494 = scmp.lt.s32.totalorder %s27, 3
      %p495 = pnand %p493, %p494
      %p496 = pneg %p495
      // Predicated region
      $region69: #{tpu_custom_call.1} parent=5 // pred_check
        _
      $region70: #{tpu_custom_call.1} parent=5 // pred_check_branch
        %498 = sbr.rel (%p495) target = $region72
      $region71: #{tpu_custom_call.1} parent=5 // pred_region
        %s499 = ssub.s32 %s27, 1
        // Predicated region
        $region73: #{tpu_custom_call.1} parent=71 // pred_check
          %p500 = pneg %p109
        $region74: #{tpu_custom_call.1} parent=71 // pred_check_branch
          %502 = sbr.rel (%p500) target = $region76
        $region75: #{tpu_custom_call.1} parent=71 // pred_region
          %503 = dma.done [#allocation4], 16
        $region76: #{tpu_custom_call.1} parent=71 // pred_fallthru
          _
        // Predicated region
        $region77: #{tpu_custom_call.1} parent=71 // pred_check
          %p504 = pneg %p130
        $region78: #{tpu_custom_call.1} parent=71 // pred_check_branch
          %506 = sbr.rel (%p504) target = $region80
        $region79: #{tpu_custom_call.1} parent=71 // pred_region
          %507 = dma.done [#allocation7], 512
        $region80: #{tpu_custom_call.1} parent=71 // pred_fallthru
          _
        // Predicated region
        $region81: #{tpu_custom_call.1} parent=71 // pred_check
          %p508 = pneg %p151
        $region82: #{tpu_custom_call.1} parent=71 // pred_check_branch
          %510 = sbr.rel (%p508) target = $region84
        $region83: #{tpu_custom_call.1} parent=71 // pred_region
          %511 = dma.done [#allocation7], 16
        $region84: #{tpu_custom_call.1} parent=71 // pred_fallthru
          _
        // Predicated region
        $region85: #{tpu_custom_call.1} parent=71 // pred_check
          %p512 = pneg %p172
        $region86: #{tpu_custom_call.1} parent=71 // pred_check_branch
          %514 = sbr.rel (%p512) target = $region88
        $region87: #{tpu_custom_call.1} parent=71 // pred_region
          %515 = dma.done [#allocation10], 2048
        $region88: #{tpu_custom_call.1} parent=71 // pred_fallthru
          _
        // Predicated region
        $region89: #{tpu_custom_call.1} parent=71 // pred_check
          %p516 = pneg %p193
        $region90: #{tpu_custom_call.1} parent=71 // pred_check_branch
          %518 = sbr.rel (%p516) target = $region92
        $region91: #{tpu_custom_call.1} parent=71 // pred_region
          %519 = dma.done [#allocation10], 32
        $region92: #{tpu_custom_call.1} parent=71 // pred_fallthru
          _
        // Predicated region
        $region93: #{tpu_custom_call.1} parent=71 // pred_check
          %p520 = pneg %p214
        $region94: #{tpu_custom_call.1} parent=71 // pred_check_branch
          %522 = sbr.rel (%p520) target = $region96
        $region95: #{tpu_custom_call.1} parent=71 // pred_region
          %523 = dma.done [#allocation13], 4096
        $region96: #{tpu_custom_call.1} parent=71 // pred_fallthru
          _
        // Predicated region
        $region97: #{tpu_custom_call.1} parent=71 // pred_check
          %p524 = pneg %p235
        $region98: #{tpu_custom_call.1} parent=71 // pred_check_branch
          %526 = sbr.rel (%p524) target = $region100
        $region99: #{tpu_custom_call.1} parent=71 // pred_region
          %527 = dma.done [#allocation13], 32
        $region100: #{tpu_custom_call.1} parent=71 // pred_fallthru
          _
        // Predicated region
        $region101: #{tpu_custom_call.1} parent=71 // pred_check
          %p528 = pneg %p256
        $region102: #{tpu_custom_call.1} parent=71 // pred_check_branch
          %530 = sbr.rel (%p528) target = $region104
        $region103: #{tpu_custom_call.1} parent=71 // pred_region
          %531 = dma.done [#allocation16], 2048
        $region104: #{tpu_custom_call.1} parent=71 // pred_fallthru
          _
        // Predicated region
        $region105: #{tpu_custom_call.1} parent=71 // pred_check
          %p532 = pneg %p277
        $region106: #{tpu_custom_call.1} parent=71 // pred_check_branch
          %534 = sbr.rel (%p532) target = $region108
        $region107: #{tpu_custom_call.1} parent=71 // pred_region
          %535 = dma.done [#allocation16], 16
        $region108: #{tpu_custom_call.1} parent=71 // pred_fallthru
          _
        %s536 = smul.u32 2, %s37
        %p537 = scmp.lt.s32.totalorder %s36, 1
        %s538 = scalar_select %p537, %s36, 1
        %p539 = scmp.lt.s32.totalorder %s536, 1
        %s540 = scalar_select %p539, %s536, 1
        %s541 = smul.addr %s538, 2
        %s542 = sadd.s32 %s540, %s541
        %s543 = smul.addr %s542, 8
        %s544 = scalar_lea.vmem %s0, %s543
        %p545 = pneg %p67
        %p546 = pneg %p64
        %p547 = pneg %p88
        %p548 = pneg %p85
        %p549 = pneg %p109
        %p550 = pneg %p106
        %p551 = pneg %p130
        %p552 = pneg %p127
        %p553 = pneg %p151
        %p554 = pneg %p148
        %p555 = pneg %p172
        %p556 = pneg %p169
        %p557 = pneg %p193
        %p558 = pneg %p190
        %p559 = pneg %p214
        %p560 = pneg %p211
        %p561 = pneg %p235
        %p562 = pneg %p232
        %p563 = pneg %p256
        %p564 = pneg %p253
        %p565 = pneg %p277
        %p566 = pneg %p274
        %p567 = pneg %p298
        %p568 = pneg %p295
        %p569 = pneg %p319
        %p570 = pneg %p316
        %p571 = pneg %p345
        %p572 = pneg %p342
        %s573 = sand.u32 %s332, 1
        %s574 = scalar_lea.sflag [#allocation5], %s573
        %s575 = sand.u32 %s332, 1
        %s576 = scalar_lea.vmem [#allocation18], %s575
        %s577 = smul.u32 2, %s37
        %p578 = scmp.lt.s32.totalorder %s36, 1
        %s579 = scalar_select %p578, %s36, 1
        %p580 = scmp.lt.s32.totalorder %s577, 1
        %s581 = scalar_select %p580, %s577, 1
        %s582 = smul.addr %s579, 2
        %s583 = sadd.s32 %s581, %s582
        %s584 = smul.addr %s583, 8
        %s585 = scalar_lea.vmem %s0, %s584
        %s586 = smul.u32 2, %s37
        %p588 = scmp.eq.s32.totalorder %s37, 0
        // Predicated region
        $region109: #{tpu_custom_call.1} parent=71 // pred_check
          %p589 = pneg %p588
        $region110: #{tpu_custom_call.1} parent=71 // pred_check_branch
          %591 = sbr.rel (%p589) target = $region112
        $region111: #{tpu_custom_call.1} parent=71 // pred_region
          %v592 = vlaneseq
          %vm593 = vcmp.ge.s32.totalorder %v592, 0
          %vm594 = vcmp.lt.s32.totalorder %v592, 256
          %vm595 = vmand %vm593, %vm594
          %596 = vst.msk [vmem:[#allocation2] sm:$0x3] %vm595, 0.0
        $region112: #{tpu_custom_call.1} parent=71 // pred_fallthru
          _
        %v597 = vld [vmem:[%s585] sm:$0xff]
        %v598 = vld [vmem:[%s585 + $0x8] sm:$0xff]
        %v599 = vpack.c.bf16 %v598, %v597
        %v600 = vld [vmem:[%s1] sm:$0xf]
        %v601 = vld [vmem:[#allocation3] sm:$0x1]
        %v603 = vlaneseq
        %v604 = vshrl.u32 %v603, 7
        %v605 = vsub.s32 0, %v604
        %v606 = vrot.slane %v601, %v605
        %vm608 = vcmask 64512
        %v610 = vsel %vm608, %v599, 0
        %vm612 = vcmask 1043456
        %v614 = vsel %vm612, %v600, 0
        %616 = vmatprep.subr.bf16.mxu0 0
        %617 = vmatpush1.bf16.msra.mxu0 0
        %618 = vmatprep.subr.bf16.mxu0 0
        %619 = vmatpush1.bf16.msra.mxu0 0
        %620 = vmatprep.subr.bf16.mxu0 0
        %621 = vmatpush1.bf16.msra.mxu0 0
        %622 = vmatprep.subr.bf16.mxu0 0
        %623 = vmatpush1.bf16.msra.mxu0 0
        %624 = vmatprep.subr.bf16.mxu0 0
        %625 = vmatpush1.bf16.msra.mxu0 0
        %626 = vmatprep.subr.bf16.mxu0 0
        %627 = vmatpush1.bf16.msra.mxu0 0
        %628 = vmatprep.subr.bf16.mxu0 0
        %629 = vmatpush1.bf16.msra.mxu0 0
        %630 = vmatprep.subr.bf16.mxu0 0
        %631 = vmatpush1.bf16.msra.mxu0 %v614
        %632 = vmatprep.subr.bf16.mxu0 0
        %633 = vmatpush2.bf16.msra.mxu0 0
        %634 = vmatprep.subr.bf16.mxu0 0
        %635 = vmatpush2.bf16.msra.mxu0 0
        %636 = vmatprep.subr.bf16.mxu0 0
        %637 = vmatpush2.bf16.msra.mxu0 0
        %638 = vmatprep.subr.bf16.mxu0 0
        %639 = vmatpush2.bf16.msra.mxu0 0
        %640 = vmatprep.subr.bf16.mxu0 0
        %641 = vmatpush2.bf16.msra.mxu0 0
        %642 = vmatprep.subr.bf16.mxu0 0
        %643 = vmatpush2.bf16.msra.mxu0 0
        %644 = vmatprep.subr.bf16.mxu0 0
        %645 = vmatpush2.bf16.msra.mxu0 0
        %646 = vmatprep.subr.bf16.mxu0 0
        %647 = vmatpush2.bf16.msra.mxu0 0
        %648 = vmatprep.mubr.bf16.mxu0 0
        %649 = vmatmul.mubr.bf16.gmra.mxu0 %v610
        %v650 = vpop.f32.mrf.mxu0
        %v651 = vadd.f32 %v606, %v650
        %v652 = vpop.f32.mrf.mxu0
        %v653 = vpop.f32.mrf.mxu0
        %v654 = vadd.f32 %v606, %v653
        %v655 = vpop.f32.mrf.mxu0
        %656 = vdwg.mxu0
        %v657 = vmax.f32 %v651, 0.0
        %v658 = vmax.f32 %v654, 0.0
        %v659 = vpack.c.bf16 %v658, %v657
        %v660 = vld [vmem:[#allocation6] sm:$0xf]
        %v661 = vld [vmem:[#allocation6 + $0x4] sm:$0xf]
        %v662 = vld [vmem:[#allocation6 + $0x8] sm:$0xf]
        %v663 = vld [vmem:[#allocation6 + $0xc] sm:$0xf]
        %v664 = vld [vmem:[#allocation6 + $0x10] sm:$0xf]
        %v665 = vld [vmem:[#allocation6 + $0x14] sm:$0xf]
        %v666 = vld [vmem:[#allocation6 + $0x18] sm:$0xf]
        %v667 = vld [vmem:[#allocation6 + $0x1c] sm:$0xf]
        %v668 = vld [vmem:[#allocation8] sm:$0x1]
        %v670 = vlaneseq
        %v671 = vshrl.u32 %v670, 7
        %v672 = vsub.s32 0, %v671
        %v673 = vrot.slane %v668, %v672
        %v683 = vunpack.c.l.b16 %v660
        %v684 = vunpack.c.l.b16 %v661
        %v685 = vunpack.c.l.b16 %v662
        %v686 = vunpack.c.l.b16 %v663
        %v687 = vunpack.c.l.b16 %v664
        %v688 = vunpack.c.l.b16 %v665
        %v689 = vunpack.c.l.b16 %v666
        %v690 = vunpack.c.l.b16 %v667
        %v691 = vpack.c.b16 %v684, %v683
        %v692 = vpack.c.b16 %v686, %v685
        %v693 = vpack.c.b16 %v688, %v687
        %v694 = vpack.c.b16 %v690, %v689
        %vm699 = vcmask 523264
        %v701 = vsel %vm699, %v659, 0
        %703 = vmatprep.subr.bf16.mxu0 0
        %704 = vmatpush1.bf16.msra.mxu0 0
        %705 = vmatprep.subr.bf16.mxu0 0
        %706 = vmatpush1.bf16.msra.mxu0 0
        %707 = vmatprep.subr.bf16.mxu0 0
        %708 = vmatpush1.bf16.msra.mxu0 0
        %709 = vmatprep.subr.bf16.mxu0 0
        %710 = vmatpush1.bf16.msra.mxu0 0
        %711 = vmatprep.subr.bf16.mxu0 0
        %712 = vmatpush1.bf16.msra.mxu0 %v694
        %713 = vmatprep.subr.bf16.mxu0 0
        %714 = vmatpush1.bf16.msra.mxu0 %v693
        %715 = vmatprep.subr.bf16.mxu0 0
        %716 = vmatpush1.bf16.msra.mxu0 %v692
        %717 = vmatprep.subr.bf16.mxu0 0
        %718 = vmatpush1.bf16.msra.mxu0 %v691
        %719 = vmatprep.subr.bf16.mxu0 0
        %720 = vmatpush2.bf16.msra.mxu0 0
        %721 = vmatprep.subr.bf16.mxu0 0
        %722 = vmatpush2.bf16.msra.mxu0 0
        %723 = vmatprep.subr.bf16.mxu0 0
        %724 = vmatpush2.bf16.msra.mxu0 0
        %725 = vmatprep.subr.bf16.mxu0 0
        %726 = vmatpush2.bf16.msra.mxu0 0
        %727 = vmatprep.subr.bf16.mxu0 0
        %728 = vmatpush2.bf16.msra.mxu0 0
        %729 = vmatprep.subr.bf16.mxu0 0
        %730 = vmatpush2.bf16.msra.mxu0 0
        %731 = vmatprep.subr.bf16.mxu0 0
        %732 = vmatpush2.bf16.msra.mxu0 0
        %733 = vmatprep.subr.bf16.mxu0 0
        %734 = vmatpush2.bf16.msra.mxu0 0
        %735 = vmatprep.mubr.bf16.mxu0 0
        %736 = vmatmul.mubr.bf16.gmra.mxu0 %v701
        %v737 = vpop.f32.mrf.mxu0
        %v738 = vadd.f32 %v673, %v737
        %v739 = vpop.f32.mrf.mxu0
        %v740 = vpop.f32.mrf.mxu0
        %v741 = vadd.f32 %v673, %v740
        %v742 = vpop.f32.mrf.mxu0
        %743 = vdwg.mxu0
        %v744 = vmax.f32 %v738, 0.0
        %v745 = vmax.f32 %v741, 0.0
        %v746 = vpack.c.bf16 %v745, %v744
        %v747 = vld [vmem:[#allocation9] sm:$0xff]
        %v748 = vld [vmem:[#allocation9 + $0x8] sm:$0xff]
        %v749 = vld [vmem:[#allocation9 + $0x10] sm:$0xff]
        %v750 = vld [vmem:[#allocation9 + $0x18] sm:$0xff]
        %v751 = vld [vmem:[#allocation9 + $0x20] sm:$0xff]
        %v752 = vld [vmem:[#allocation9 + $0x28] sm:$0xff]
        %v753 = vld [vmem:[#allocation9 + $0x30] sm:$0xff]
        %v754 = vld [vmem:[#allocation9 + $0x38] sm:$0xff]
        %v755 = vld [vmem:[#allocation9 + $0x40] sm:$0xff]
        %v756 = vld [vmem:[#allocation9 + $0x48] sm:$0xff]
        %v757 = vld [vmem:[#allocation9 + $0x50] sm:$0xff]
        %v758 = vld [vmem:[#allocation9 + $0x58] sm:$0xff]
        %v759 = vld [vmem:[#allocation9 + $0x60] sm:$0xff]
        %v760 = vld [vmem:[#allocation9 + $0x68] sm:$0xff]
        %v761 = vld [vmem:[#allocation9 + $0x70] sm:$0xff]
        %v762 = vld [vmem:[#allocation9 + $0x78] sm:$0xff]
        %v763 = vld [vmem:[#allocation11] sm:$0x3]
        %v765 = vlaneseq
        %v766 = vshrl.u32 %v765, 7
        %v767 = vsub.s32 0, %v766
        %v768 = vrot.slane %v763, %v767
        %v769 = vlaneseq
        %v770 = vshrl.u32 %v769, 7
        %v771 = vsub.s32 1, %v770
        %v772 = vrot.slane %v763, %v771
        %v791 = vunpack.c.l.b16 %v747
        %v792 = vunpack.c.h.b16 %v747
        %v793 = vunpack.c.l.b16 %v748
        %v794 = vunpack.c.h.b16 %v748
        %v795 = vunpack.c.l.b16 %v749
        %v796 = vunpack.c.h.b16 %v749
        %v797 = vunpack.c.l.b16 %v750
        %v798 = vunpack.c.h.b16 %v750
        %v799 = vunpack.c.l.b16 %v751
        %v800 = vunpack.c.h.b16 %v751
        %v801 = vunpack.c.l.b16 %v752
        %v802 = vunpack.c.h.b16 %v752
        %v803 = vunpack.c.l.b16 %v753
        %v804 = vunpack.c.h.b16 %v753
        %v805 = vunpack.c.l.b16 %v754
        %v806 = vunpack.c.h.b16 %v754
        %v807 = vunpack.c.l.b16 %v755
        %v808 = vunpack.c.h.b16 %v755
        %v809 = vunpack.c.l.b16 %v756
        %v810 = vunpack.c.h.b16 %v756
        %v811 = vunpack.c.l.b16 %v757
        %v812 = vunpack.c.h.b16 %v757
        %v813 = vunpack.c.l.b16 %v758
        %v814 = vunpack.c.h.b16 %v758
        %v815 = vunpack.c.l.b16 %v759
        %v816 = vunpack.c.h.b16 %v759
        %v817 = vunpack.c.l.b16 %v760
        %v818 = vunpack.c.h.b16 %v760
        %v819 = vunpack.c.l.b16 %v761
        %v820 = vunpack.c.h.b16 %v761
        %v821 = vunpack.c.l.b16 %v762
        %v822 = vunpack.c.h.b16 %v762
        %v823 = vpack.c.b16 %v793, %v791
        %v824 = vpack.c.b16 %v794, %v792
        %v825 = vpack.c.b16 %v797, %v795
        %v826 = vpack.c.b16 %v798, %v796
        %v827 = vpack.c.b16 %v801, %v799
        %v828 = vpack.c.b16 %v802, %v800
        %v829 = vpack.c.b16 %v805, %v803
        %v830 = vpack.c.b16 %v806, %v804
        %v831 = vpack.c.b16 %v809, %v807
        %v832 = vpack.c.b16 %v810, %v808
        %v833 = vpack.c.b16 %v813, %v811
        %v834 = vpack.c.b16 %v814, %v812
        %v835 = vpack.c.b16 %v817, %v815
        %v836 = vpack.c.b16 %v818, %v816
        %v837 = vpack.c.b16 %v821, %v819
        %v838 = vpack.c.b16 %v822, %v820
        %855 = vmatprep.subr.bf16.mxu0 %v838
        %856 = vmatpush1.bf16.msra.mxu0 %v837
        %857 = vmatprep.subr.bf16.mxu0 %v836
        %858 = vmatpush1.bf16.msra.mxu0 %v835
        %859 = vmatprep.subr.bf16.mxu0 %v834
        %860 = vmatpush1.bf16.msra.mxu0 %v833
        %861 = vmatprep.subr.bf16.mxu0 %v832
        %862 = vmatpush1.bf16.msra.mxu0 %v831
        %863 = vmatprep.subr.bf16.mxu0 %v830
        %864 = vmatpush1.bf16.msra.mxu0 %v829
        %865 = vmatprep.subr.bf16.mxu0 %v828
        %866 = vmatpush1.bf16.msra.mxu0 %v827
        %867 = vmatprep.subr.bf16.mxu0 %v826
        %868 = vmatpush1.bf16.msra.mxu0 %v825
        %869 = vmatprep.subr.bf16.mxu0 %v824
        %870 = vmatpush1.bf16.msra.mxu0 %v823
        %871 = vmatprep.subr.bf16.mxu0 0
        %872 = vmatpush2.bf16.msra.mxu0 0
        %873 = vmatprep.subr.bf16.mxu0 0
        %874 = vmatpush2.bf16.msra.mxu0 0
        %875 = vmatprep.subr.bf16.mxu0 0
        %876 = vmatpush2.bf16.msra.mxu0 0
        %877 = vmatprep.subr.bf16.mxu0 0
        %878 = vmatpush2.bf16.msra.mxu0 0
        %879 = vmatprep.subr.bf16.mxu0 0
        %880 = vmatpush2.bf16.msra.mxu0 0
        %881 = vmatprep.subr.bf16.mxu0 0
        %882 = vmatpush2.bf16.msra.mxu0 0
        %883 = vmatprep.subr.bf16.mxu0 0
        %884 = vmatpush2.bf16.msra.mxu0 0
        %885 = vmatprep.subr.bf16.mxu0 0
        %886 = vmatpush2.bf16.msra.mxu0 0
        %887 = vmatprep.mubr.bf16.mxu0 0
        %888 = vmatmul.mubr.bf16.gmra.mxu0 %v746
        %v889 = vpop.f32.mrf.mxu0
        %v890 = vadd.f32 %v768, %v889
        %v891 = vpop.f32.mrf.mxu0
        %v892 = vadd.f32 %v772, %v891
        %v893 = vpop.f32.mrf.mxu0
        %v894 = vadd.f32 %v768, %v893
        %v895 = vpop.f32.mrf.mxu0
        %v896 = vadd.f32 %v772, %v895
        %897 = vdwg.mxu0
        %v898 = vmax.f32 %v890, 0.0
        %v899 = vmax.f32 %v892, 0.0
        %v900 = vmax.f32 %v894, 0.0
        %v901 = vmax.f32 %v896, 0.0
        %s902 = smul.u32 %s37, 16
        %v903 = vlaneseq
        %v904 = vshrl.u32 %v903, 7
        %v905 = vadd.s32 %v904, 8
        %v906 = vstv %s902
        %v907 = vadd.s32 %v906, %v904
        %v908 = vadd.s32 %v906, %v905
        %vm909 = vcmp.lt.s32.totalorder %v907, 16
        %vm910 = vcmp.lt.s32.totalorder %v908, 16
        %v911 = vsel %vm909, 1, 0
        %v912 = vsel %vm910, 1, 0
        %vm913 = vcmp.eq.s32.totalorder %v911, 1
        %vm914 = vcmp.eq.s32.totalorder %v912, 1
        %v915 = vsel %vm913, %v898, 0.0
        %v916 = vsel %vm913, %v899, 0.0
        %v917 = vsel %vm914, %v900, 0.0
        %v918 = vsel %vm914, %v901, 0.0
        %v919 = vld [vmem:[#allocation2] sm:$0x3]
        %v920 = vmax.f32 %v915, %v917
        %v921 = vrot.slane %v920, 4
        %v922 = vmax.f32 %v920, %v921
        %v923 = vrot.slane %v922, 2
        %v924 = vmax.f32 %v922, %v923
        %v925 = vrot.slane %v924, 1
        %v926 = vmax.f32 %v924, %v925
        %v927 = vmax.f32 %v916, %v918
        %v928 = vrot.slane %v927, 4
        %v929 = vmax.f32 %v927, %v928
        %v930 = vrot.slane %v929, 2
        %v931 = vmax.f32 %v929, %v930
        %v932 = vrot.slane %v931, 1
        %v933 = vmax.f32 %v931, %v932
        %v936 = vcombine.low %v926, %v933
        %v938 = vunpack.c.l.s4 1966171168
        %v939 = vunpack.c.0.s8 %v938
        %v940 = vlaneseq
        %v941 = vshrl.u32 %v940, 7
        %v942 = vsub.s32 %v939, %v941
        %v943 = vrot.slane %v936, %v942
        %v945 = vunpack.c.l.s4 1966171168
        %v946 = vunpack.c.0.s8 %v945
        %v947 = vlaneseq
        %v948 = vshrl.u32 %v947, 7
        %v949 = vsub.s32 %v946, %v948
        %v950 = vrot.slane %v943, %v949
        %v952 = vmax.f32 %v919, %v950
        %v953 = vlaneseq
        %vm954 = vcmp.ge.s32.totalorder %v953, 0
        %vm955 = vcmp.lt.s32.totalorder %v953, 256
        %vm956 = vmand %vm954, %vm955
        %957 = vst.msk [vmem:[#allocation2] sm:$0x3] %vm956, %v952
        // Predicated region
        $region113: #{tpu_custom_call.1} parent=71 // pred_check
          %p958 = pneg %p588
        $region114: #{tpu_custom_call.1} parent=71 // pred_check_branch
          %960 = sbr.rel (%p958) target = $region116
        $region115: #{tpu_custom_call.1} parent=71 // pred_region
          %v961 = vld [vmem:[#allocation2] sm:$0x3]
          %v963 = vlaneseq
          %v964 = vshrl.u32 %v963, 7
          %v965 = vsub.s32 0, %v964
          %v966 = vrot.slane %v961, %v965
          %v967 = vlaneseq
          %v968 = vshrl.u32 %v967, 7
          %v969 = vsub.s32 1, %v968
          %v970 = vrot.slane %v961, %v969
          %v973 = vpack.c.bf16 %v966, %v966
          %v974 = vpack.c.bf16 %v970, %v970
          %v975 = vld [vmem:[#allocation12] sm:$0xff]
          %v976 = vld [vmem:[#allocation12 + $0x8] sm:$0xff]
          %v977 = vld [vmem:[#allocation12 + $0x10] sm:$0xff]
          %v978 = vld [vmem:[#allocation12 + $0x18] sm:$0xff]
          %v979 = vld [vmem:[#allocation12 + $0x20] sm:$0xff]
          %v980 = vld [vmem:[#allocation12 + $0x28] sm:$0xff]
          %v981 = vld [vmem:[#allocation12 + $0x30] sm:$0xff]
          %v982 = vld [vmem:[#allocation12 + $0x38] sm:$0xff]
          %v983 = vld [vmem:[#allocation12 + $0x40] sm:$0xff]
          %v984 = vld [vmem:[#allocation12 + $0x48] sm:$0xff]
          %v985 = vld [vmem:[#allocation12 + $0x50] sm:$0xff]
          %v986 = vld [vmem:[#allocation12 + $0x58] sm:$0xff]
          %v987 = vld [vmem:[#allocation12 + $0x60] sm:$0xff]
          %v988 = vld [vmem:[#allocation12 + $0x68] sm:$0xff]
          %v989 = vld [vmem:[#allocation12 + $0x70] sm:$0xff]
          %v990 = vld [vmem:[#allocation12 + $0x78] sm:$0xff]
          %v991 = vld [vmem:[#allocation12 + $0x80] sm:$0xff]
          %v992 = vld [vmem:[#allocation12 + $0x88] sm:$0xff]
          %v993 = vld [vmem:[#allocation12 + $0x90] sm:$0xff]
          %v994 = vld [vmem:[#allocation12 + $0x98] sm:$0xff]
          %v995 = vld [vmem:[#allocation12 + $0xa0] sm:$0xff]
          %v996 = vld [vmem:[#allocation12 + $0xa8] sm:$0xff]
          %v997 = vld [vmem:[#allocation12 + $0xb0] sm:$0xff]
          %v998 = vld [vmem:[#allocation12 + $0xb8] sm:$0xff]
          %v999 = vld [vmem:[#allocation12 + $0xc0] sm:$0xff]
          %v1000 = vld [vmem:[#allocation12 + $0xc8] sm:$0xff]
          %v1001 = vld [vmem:[#allocation12 + $0xd0] sm:$0xff]
          %v1002 = vld [vmem:[#allocation12 + $0xd8] sm:$0xff]
          %v1003 = vld [vmem:[#allocation12 + $0xe0] sm:$0xff]
          %v1004 = vld [vmem:[#allocation12 + $0xe8] sm:$0xff]
          %v1005 = vld [vmem:[#allocation12 + $0xf0] sm:$0xff]
          %v1006 = vld [vmem:[#allocation12 + $0xf8] sm:$0xff]
          %v1007 = vld [vmem:[#allocation14] sm:$0x3]
          %v1040 = vunpack.c.l.b16 %v975
          %v1041 = vunpack.c.h.b16 %v975
          %v1042 = vunpack.c.l.b16 %v976
          %v1043 = vunpack.c.h.b16 %v976
          %v1044 = vunpack.c.l.b16 %v977
          %v1045 = vunpack.c.h.b16 %v977
          %v1046 = vunpack.c.l.b16 %v978
          %v1047 = vunpack.c.h.b16 %v978
          %v1048 = vunpack.c.l.b16 %v979
          %v1049 = vunpack.c.h.b16 %v979
          %v1050 = vunpack.c.l.b16 %v980
          %v1051 = vunpack.c.h.b16 %v980
          %v1052 = vunpack.c.l.b16 %v981
          %v1053 = vunpack.c.h.b16 %v981
          %v1054 = vunpack.c.l.b16 %v982
          %v1055 = vunpack.c.h.b16 %v982
          %v1056 = vunpack.c.l.b16 %v983
          %v1057 = vunpack.c.h.b16 %v983
          %v1058 = vunpack.c.l.b16 %v984
          %v1059 = vunpack.c.h.b16 %v984
          %v1060 = vunpack.c.l.b16 %v985
          %v1061 = vunpack.c.h.b16 %v985
          %v1062 = vunpack.c.l.b16 %v986
          %v1063 = vunpack.c.h.b16 %v986
          %v1064 = vunpack.c.l.b16 %v987
          %v1065 = vunpack.c.h.b16 %v987
          %v1066 = vunpack.c.l.b16 %v988
          %v1067 = vunpack.c.h.b16 %v988
          %v1068 = vunpack.c.l.b16 %v989
          %v1069 = vunpack.c.h.b16 %v989
          %v1070 = vunpack.c.l.b16 %v990
          %v1071 = vunpack.c.h.b16 %v990
          %v1072 = vunpack.c.l.b16 %v991
          %v1073 = vunpack.c.h.b16 %v991
          %v1074 = vunpack.c.l.b16 %v992
          %v1075 = vunpack.c.h.b16 %v992
          %v1076 = vunpack.c.l.b16 %v993
          %v1077 = vunpack.c.h.b16 %v993
          %v1078 = vunpack.c.l.b16 %v994
          %v1079 = vunpack.c.h.b16 %v994
          %v1080 = vunpack.c.l.b16 %v995
          %v1081 = vunpack.c.h.b16 %v995
          %v1082 = vunpack.c.l.b16 %v996
          %v1083 = vunpack.c.h.b16 %v996
          %v1084 = vunpack.c.l.b16 %v997
          %v1085 = vunpack.c.h.b16 %v997
          %v1086 = vunpack.c.l.b16 %v998
          %v1087 = vunpack.c.h.b16 %v998
          %v1088 = vunpack.c.l.b16 %v999
          %v1089 = vunpack.c.h.b16 %v999
          %v1090 = vunpack.c.l.b16 %v1000
          %v1091 = vunpack.c.h.b16 %v1000
          %v1092 = vunpack.c.l.b16 %v1001
          %v1093 = vunpack.c.h.b16 %v1001
          %v1094 = vunpack.c.l.b16 %v1002
          %v1095 = vunpack.c.h.b16 %v1002
          %v1096 = vunpack.c.l.b16 %v1003
          %v1097 = vunpack.c.h.b16 %v1003
          %v1098 = vunpack.c.l.b16 %v1004
          %v1099 = vunpack.c.h.b16 %v1004
          %v1100 = vunpack.c.l.b16 %v1005
          %v1101 = vunpack.c.h.b16 %v1005
          %v1102 = vunpack.c.l.b16 %v1006
          %v1103 = vunpack.c.h.b16 %v1006
          %v1104 = vpack.c.b16 %v1042, %v1040
          %v1105 = vpack.c.b16 %v1043, %v1041
          %v1106 = vpack.c.b16 %v1046, %v1044
          %v1107 = vpack.c.b16 %v1047, %v1045
          %v1108 = vpack.c.b16 %v1050, %v1048
          %v1109 = vpack.c.b16 %v1051, %v1049
          %v1110 = vpack.c.b16 %v1054, %v1052
          %v1111 = vpack.c.b16 %v1055, %v1053
          %v1112 = vpack.c.b16 %v1058, %v1056
          %v1113 = vpack.c.b16 %v1059, %v1057
          %v1114 = vpack.c.b16 %v1062, %v1060
          %v1115 = vpack.c.b16 %v1063, %v1061
          %v1116 = vpack.c.b16 %v1066, %v1064
          %v1117 = vpack.c.b16 %v1067, %v1065
          %v1118 = vpack.c.b16 %v1070, %v1068
          %v1119 = vpack.c.b16 %v1071, %v1069
          %v1120 = vpack.c.b16 %v1074, %v1072
          %v1121 = vpack.c.b16 %v1075, %v1073
          %v1122 = vpack.c.b16 %v1078, %v1076
          %v1123 = vpack.c.b16 %v1079, %v1077
          %v1124 = vpack.c.b16 %v1082, %v1080
          %v1125 = vpack.c.b16 %v1083, %v1081
          %v1126 = vpack.c.b16 %v1086, %v1084
          %v1127 = vpack.c.b16 %v1087, %v1085
          %v1128 = vpack.c.b16 %v1090, %v1088
          %v1129 = vpack.c.b16 %v1091, %v1089
          %v1130 = vpack.c.b16 %v1094, %v1092
          %v1131 = vpack.c.b16 %v1095, %v1093
          %v1132 = vpack.c.b16 %v1098, %v1096
          %v1133 = vpack.c.b16 %v1099, %v1097
          %v1134 = vpack.c.b16 %v1102, %v1100
          %v1135 = vpack.c.b16 %v1103, %v1101
          %v1169 = vlaneseq
          %v1170 = vshrl.u32 %v1169, 7
          %v1171 = vsub.s32 0, %v1170
          %v1172 = vrot.slane %v1007, %v1171
          %v1173 = vlaneseq
          %v1174 = vshrl.u32 %v1173, 7
          %v1175 = vsub.s32 1, %v1174
          %v1176 = vrot.slane %v1007, %v1175
          %1179 = vmatprep.subr.bf16.mxu0 %v1119
          %1180 = vmatpush1.bf16.msra.mxu0 %v1118
          %1181 = vmatprep.subr.bf16.mxu0 %v1117
          %1182 = vmatpush1.bf16.msra.mxu0 %v1116
          %1183 = vmatprep.subr.bf16.mxu0 %v1115
          %1184 = vmatpush1.bf16.msra.mxu0 %v1114
          %1185 = vmatprep.subr.bf16.mxu0 %v1113
          %1186 = vmatpush1.bf16.msra.mxu0 %v1112
          %1187 = vmatprep.subr.bf16.mxu0 %v1111
          %1188 = vmatpush1.bf16.msra.mxu0 %v1110
          %1189 = vmatprep.subr.bf16.mxu0 %v1109
          %1190 = vmatpush1.bf16.msra.mxu0 %v1108
          %1191 = vmatprep.subr.bf16.mxu0 %v1107
          %1192 = vmatpush1.bf16.msra.mxu0 %v1106
          %1193 = vmatprep.subr.bf16.mxu0 %v1105
          %1194 = vmatpush1.bf16.msra.mxu0 %v1104
          %1195 = vmatprep.subr.bf16.mxu0 %v1135
          %1196 = vmatpush2.bf16.msra.mxu0 %v1134
          %1197 = vmatprep.subr.bf16.mxu0 %v1133
          %1198 = vmatpush2.bf16.msra.mxu0 %v1132
          %1199 = vmatprep.subr.bf16.mxu0 %v1131
          %1200 = vmatpush2.bf16.msra.mxu0 %v1130
          %1201 = vmatprep.subr.bf16.mxu0 %v1129
          %1202 = vmatpush2.bf16.msra.mxu0 %v1128
          %1203 = vmatprep.subr.bf16.mxu0 %v1127
          %1204 = vmatpush2.bf16.msra.mxu0 %v1126
          %1205 = vmatprep.subr.bf16.mxu0 %v1125
          %1206 = vmatpush2.bf16.msra.mxu0 %v1124
          %1207 = vmatprep.subr.bf16.mxu0 %v1123
          %1208 = vmatpush2.bf16.msra.mxu0 %v1122
          %1209 = vmatprep.subr.bf16.mxu0 %v1121
          %1210 = vmatpush2.bf16.msra.mxu0 %v1120
          %1211 = vmatprep.mubr.bf16.mxu0 %v974
          %1212 = vmatmul.mubr.bf16.gmra.mxu0 %v973
          %v1213 = vpop.f32.mrf.mxu0
          %v1214 = vadd.f32 %v1172, %v1213
          %v1215 = vpop.f32.mrf.mxu0
          %v1216 = vadd.f32 %v1176, %v1215
          %v1217 = vpop.f32.mrf.mxu0
          %v1218 = vpop.f32.mrf.mxu0
          %1219 = vdwg.mxu0
          %v1220 = vmax.f32 %v1214, 0.0
          %v1221 = vmax.f32 %v1216, 0.0
          %v1222 = vpack.c.bf16 %v1220, %v1220
          %v1223 = vpack.c.bf16 %v1221, %v1221
          %v1224 = vld [vmem:[#allocation15] sm:$0xf]
          %v1225 = vld [vmem:[#allocation15 + $0x4] sm:$0xf]
          %v1226 = vld [vmem:[#allocation15 + $0x8] sm:$0xf]
          %v1227 = vld [vmem:[#allocation15 + $0xc] sm:$0xf]
          %v1228 = vld [vmem:[#allocation15 + $0x10] sm:$0xf]
          %v1229 = vld [vmem:[#allocation15 + $0x14] sm:$0xf]
          %v1230 = vld [vmem:[#allocation15 + $0x18] sm:$0xf]
          %v1231 = vld [vmem:[#allocation15 + $0x1c] sm:$0xf]
          %v1232 = vld [vmem:[#allocation15 + $0x20] sm:$0xf]
          %v1233 = vld [vmem:[#allocation15 + $0x24] sm:$0xf]
          %v1234 = vld [vmem:[#allocation15 + $0x28] sm:$0xf]
          %v1235 = vld [vmem:[#allocation15 + $0x2c] sm:$0xf]
          %v1236 = vld [vmem:[#allocation15 + $0x30] sm:$0xf]
          %v1237 = vld [vmem:[#allocation15 + $0x34] sm:$0xf]
          %v1238 = vld [vmem:[#allocation15 + $0x38] sm:$0xf]
          %v1239 = vld [vmem:[#allocation15 + $0x3c] sm:$0xf]
          %v1240 = vld [vmem:[#allocation15 + $0x40] sm:$0xf]
          %v1241 = vld [vmem:[#allocation15 + $0x44] sm:$0xf]
          %v1242 = vld [vmem:[#allocation15 + $0x48] sm:$0xf]
          %v1243 = vld [vmem:[#allocation15 + $0x4c] sm:$0xf]
          %v1244 = vld [vmem:[#allocation15 + $0x50] sm:$0xf]
          %v1245 = vld [vmem:[#allocation15 + $0x54] sm:$0xf]
          %v1246 = vld [vmem:[#allocation15 + $0x58] sm:$0xf]
          %v1247 = vld [vmem:[#allocation15 + $0x5c] sm:$0xf]
          %v1248 = vld [vmem:[#allocation15 + $0x60] sm:$0xf]
          %v1249 = vld [vmem:[#allocation15 + $0x64] sm:$0xf]
          %v1250 = vld [vmem:[#allocation15 + $0x68] sm:$0xf]
          %v1251 = vld [vmem:[#allocation15 + $0x6c] sm:$0xf]
          %v1252 = vld [vmem:[#allocation15 + $0x70] sm:$0xf]
          %v1253 = vld [vmem:[#allocation15 + $0x74] sm:$0xf]
          %v1254 = vld [vmem:[#allocation15 + $0x78] sm:$0xf]
          %v1255 = vld [vmem:[#allocation15 + $0x7c] sm:$0xf]
          %v1256 = vld [vmem:[#allocation17] sm:$0x1]
          %v1289 = vunpack.c.l.b16 %v1224
          %v1290 = vunpack.c.l.b16 %v1225
          %v1291 = vunpack.c.l.b16 %v1226
          %v1292 = vunpack.c.l.b16 %v1227
          %v1293 = vunpack.c.l.b16 %v1228
          %v1294 = vunpack.c.l.b16 %v1229
          %v1295 = vunpack.c.l.b16 %v1230
          %v1296 = vunpack.c.l.b16 %v1231
          %v1297 = vunpack.c.l.b16 %v1232
          %v1298 = vunpack.c.l.b16 %v1233
          %v1299 = vunpack.c.l.b16 %v1234
          %v1300 = vunpack.c.l.b16 %v1235
          %v1301 = vunpack.c.l.b16 %v1236
          %v1302 = vunpack.c.l.b16 %v1237
          %v1303 = vunpack.c.l.b16 %v1238
          %v1304 = vunpack.c.l.b16 %v1239
          %v1305 = vunpack.c.l.b16 %v1240
          %v1306 = vunpack.c.l.b16 %v1241
          %v1307 = vunpack.c.l.b16 %v1242
          %v1308 = vunpack.c.l.b16 %v1243
          %v1309 = vunpack.c.l.b16 %v1244
          %v1310 = vunpack.c.l.b16 %v1245
          %v1311 = vunpack.c.l.b16 %v1246
          %v1312 = vunpack.c.l.b16 %v1247
          %v1313 = vunpack.c.l.b16 %v1248
          %v1314 = vunpack.c.l.b16 %v1249
          %v1315 = vunpack.c.l.b16 %v1250
          %v1316 = vunpack.c.l.b16 %v1251
          %v1317 = vunpack.c.l.b16 %v1252
          %v1318 = vunpack.c.l.b16 %v1253
          %v1319 = vunpack.c.l.b16 %v1254
          %v1320 = vunpack.c.l.b16 %v1255
          %v1321 = vpack.c.b16 %v1290, %v1289
          %v1322 = vpack.c.b16 %v1292, %v1291
          %v1323 = vpack.c.b16 %v1294, %v1293
          %v1324 = vpack.c.b16 %v1296, %v1295
          %v1325 = vpack.c.b16 %v1298, %v1297
          %v1326 = vpack.c.b16 %v1300, %v1299
          %v1327 = vpack.c.b16 %v1302, %v1301
          %v1328 = vpack.c.b16 %v1304, %v1303
          %v1329 = vpack.c.b16 %v1306, %v1305
          %v1330 = vpack.c.b16 %v1308, %v1307
          %v1331 = vpack.c.b16 %v1310, %v1309
          %v1332 = vpack.c.b16 %v1312, %v1311
          %v1333 = vpack.c.b16 %v1314, %v1313
          %v1334 = vpack.c.b16 %v1316, %v1315
          %v1335 = vpack.c.b16 %v1318, %v1317
          %v1336 = vpack.c.b16 %v1320, %v1319
          %1353 = vmatprep.subr.bf16.mxu0 0
          %1354 = vmatpush1.bf16.msra.mxu0 %v1328
          %1355 = vmatprep.subr.bf16.mxu0 0
          %1356 = vmatpush1.bf16.msra.mxu0 %v1327
          %1357 = vmatprep.subr.bf16.mxu0 0
          %1358 = vmatpush1.bf16.msra.mxu0 %v1326
          %1359 = vmatprep.subr.bf16.mxu0 0
          %1360 = vmatpush1.bf16.msra.mxu0 %v1325
          %1361 = vmatprep.subr.bf16.mxu0 0
          %1362 = vmatpush1.bf16.msra.mxu0 %v1324
          %1363 = vmatprep.subr.bf16.mxu0 0
          %1364 = vmatpush1.bf16.msra.mxu0 %v1323
          %1365 = vmatprep.subr.bf16.mxu0 0
          %1366 = vmatpush1.bf16.msra.mxu0 %v1322
          %1367 = vmatprep.subr.bf16.mxu0 0
          %1368 = vmatpush1.bf16.msra.mxu0 %v1321
          %1369 = vmatprep.subr.bf16.mxu0 0
          %1370 = vmatpush2.bf16.msra.mxu0 %v1336
          %1371 = vmatprep.subr.bf16.mxu0 0
          %1372 = vmatpush2.bf16.msra.mxu0 %v1335
          %1373 = vmatprep.subr.bf16.mxu0 0
          %1374 = vmatpush2.bf16.msra.mxu0 %v1334
          %1375 = vmatprep.subr.bf16.mxu0 0
          %1376 = vmatpush2.bf16.msra.mxu0 %v1333
          %1377 = vmatprep.subr.bf16.mxu0 0
          %1378 = vmatpush2.bf16.msra.mxu0 %v1332
          %1379 = vmatprep.subr.bf16.mxu0 0
          %1380 = vmatpush2.bf16.msra.mxu0 %v1331
          %1381 = vmatprep.subr.bf16.mxu0 0
          %1382 = vmatpush2.bf16.msra.mxu0 %v1330
          %1383 = vmatprep.subr.bf16.mxu0 0
          %1384 = vmatpush2.bf16.msra.mxu0 %v1329
          %1385 = vmatprep.mubr.bf16.mxu0 %v1223
          %1386 = vmatmul.mubr.bf16.gmra.mxu0 %v1222
          %v1387 = vpop.f32.mrf.mxu0
          %v1388 = vadd.f32 %v1256, %v1387
          %v1389 = vpop.f32.mrf.mxu0
          %v1390 = vpop.f32.mrf.mxu0
          %v1391 = vpop.f32.mrf.mxu0
          %1392 = vdwg.mxu0
          %v1393 = vmax.f32 %v1388, 0.0
          %v1394 = vpack.c.bf16 %v1393, %v1393
          %v1395 = vld [vmem:[%s11] sm:$0xf]
          %v1396 = vld [vmem:[%s11 + $0x4] sm:$0xf]
          %v1397 = vld [vmem:[%s11 + $0x8] sm:$0xf]
          %v1398 = vld [vmem:[%s11 + $0xc] sm:$0xf]
          %v1399 = vld [vmem:[%s11 + $0x10] sm:$0xf]
          %v1400 = vld [vmem:[%s11 + $0x14] sm:$0xf]
          %v1401 = vld [vmem:[%s11 + $0x18] sm:$0xf]
          %v1402 = vld [vmem:[%s11 + $0x1c] sm:$0xf]
          %v1403 = vld [vmem:[%s11 + $0x20] sm:$0xf]
          %v1404 = vld [vmem:[%s11 + $0x24] sm:$0xf]
          %v1405 = vld [vmem:[%s11 + $0x28] sm:$0xf]
          %v1406 = vld [vmem:[%s11 + $0x2c] sm:$0xf]
          %v1407 = vld [vmem:[%s11 + $0x30] sm:$0xf]
          %v1408 = vld [vmem:[%s11 + $0x34] sm:$0xf]
          %v1409 = vld [vmem:[%s11 + $0x38] sm:$0xf]
          %v1410 = vld [vmem:[%s11 + $0x3c] sm:$0xf]
          %v1411 = vld [vmem:[%s12] sm:$0x1]
          %v1428 = vunpack.c.l.b16 %v1395
          %v1429 = vunpack.c.l.b16 %v1396
          %v1430 = vunpack.c.l.b16 %v1397
          %v1431 = vunpack.c.l.b16 %v1398
          %v1432 = vunpack.c.l.b16 %v1399
          %v1433 = vunpack.c.l.b16 %v1400
          %v1434 = vunpack.c.l.b16 %v1401
          %v1435 = vunpack.c.l.b16 %v1402
          %v1436 = vunpack.c.l.b16 %v1403
          %v1437 = vunpack.c.l.b16 %v1404
          %v1438 = vunpack.c.l.b16 %v1405
          %v1439 = vunpack.c.l.b16 %v1406
          %v1440 = vunpack.c.l.b16 %v1407
          %v1441 = vunpack.c.l.b16 %v1408
          %v1442 = vunpack.c.l.b16 %v1409
          %v1443 = vunpack.c.l.b16 %v1410
          %v1444 = vpack.c.b16 %v1429, %v1428
          %v1445 = vpack.c.b16 %v1431, %v1430
          %v1446 = vpack.c.b16 %v1433, %v1432
          %v1447 = vpack.c.b16 %v1435, %v1434
          %v1448 = vpack.c.b16 %v1437, %v1436
          %v1449 = vpack.c.b16 %v1439, %v1438
          %v1450 = vpack.c.b16 %v1441, %v1440
          %v1451 = vpack.c.b16 %v1443, %v1442
          %1460 = vmatprep.subr.bf16.mxu0 0
          %1461 = vmatpush1.bf16.msra.mxu0 %v1451
          %1462 = vmatprep.subr.bf16.mxu0 0
          %1463 = vmatpush1.bf16.msra.mxu0 %v1450
          %1464 = vmatprep.subr.bf16.mxu0 0
          %1465 = vmatpush1.bf16.msra.mxu0 %v1449
          %1466 = vmatprep.subr.bf16.mxu0 0
          %1467 = vmatpush1.bf16.msra.mxu0 %v1448
          %1468 = vmatprep.subr.bf16.mxu0 0
          %1469 = vmatpush1.bf16.msra.mxu0 %v1447
          %1470 = vmatprep.subr.bf16.mxu0 0
          %1471 = vmatpush1.bf16.msra.mxu0 %v1446
          %1472 = vmatprep.subr.bf16.mxu0 0
          %1473 = vmatpush1.bf16.msra.mxu0 %v1445
          %1474 = vmatprep.subr.bf16.mxu0 0
          %1475 = vmatpush1.bf16.msra.mxu0 %v1444
          %1476 = vmatprep.subr.bf16.mxu0 0
          %1477 = vmatpush2.bf16.msra.mxu0 0
          %1478 = vmatprep.subr.bf16.mxu0 0
          %1479 = vmatpush2.bf16.msra.mxu0 0
          %1480 = vmatprep.subr.bf16.mxu0 0
          %1481 = vmatpush2.bf16.msra.mxu0 0
          %1482 = vmatprep.subr.bf16.mxu0 0
          %1483 = vmatpush2.bf16.msra.mxu0 0
          %1484 = vmatprep.subr.bf16.mxu0 0
          %1485 = vmatpush2.bf16.msra.mxu0 0
          %1486 = vmatprep.subr.bf16.mxu0 0
          %1487 = vmatpush2.bf16.msra.mxu0 0
          %1488 = vmatprep.subr.bf16.mxu0 0
          %1489 = vmatpush2.bf16.msra.mxu0 0
          %1490 = vmatprep.subr.bf16.mxu0 0
          %1491 = vmatpush2.bf16.msra.mxu0 0
          %1492 = vmatprep.mubr.bf16.mxu0 0
          %1493 = vmatmul.mubr.bf16.gmra.mxu0 %v1394
          %v1494 = vpop.f32.mrf.mxu0
          %v1495 = vadd.f32 %v1411, %v1494
          %v1496 = vpop.f32.mrf.mxu0
          %v1497 = vpop.f32.mrf.mxu0
          %v1498 = vpop.f32.mrf.mxu0
          %1499 = vdwg.mxu0
          %1500 = vst [vmem:[%s576] sm:$0x1] %v1495
        $region116: #{tpu_custom_call.1} parent=71 // pred_fallthru
          _
        %s1501 = sand.u32 %s332, 1
        %s1502 = scalar_lea.sflag [#allocation5], %s1501
        %s1503 = sand.u32 %s332, 1
        %s1504 = scalar_lea.vmem [#allocation18], %s1503
        // Predicated region
        $region117: #{tpu_custom_call.1} parent=71 // pred_check
          %p1505 = pneg %p342
        $region118: #{tpu_custom_call.1} parent=71 // pred_check_branch
          %1507 = sbr.rel (%p1505) target = $region120
        $region119: #{tpu_custom_call.1} parent=71 // pred_region
          %s1509 = ssub.s32 16, 16
          %1510 = vsyncadd %s1502, %s1509
          %s1511 = smul.addr %s36, 16
          %s1512 = scalar_lea.hbm %s13, %s1511
          %s1514 = sshll.u32 %s1504, 4
          %s1515 = int_to_ptr.vmem [resolvable:$true] %s1514
          %1517 = dma.vmem_to_hbm [thread:$0]  %s1515, 16, %s1512, %s1502
        $region120: #{tpu_custom_call.1} parent=71 // pred_fallthru
          _
      $region72: #{tpu_custom_call.1} parent=5 // pred_fallthru
        _
      %p1518 = scmp.le.s32.totalorder 2, %s27
      // Predicated region
      $region121: #{tpu_custom_call.1} parent=5 // pred_check
        %p1519 = pneg %p1518
      $region122: #{tpu_custom_call.1} parent=5 // pred_check_branch
        %1521 = sbr.rel (%p1519) target = $region124
      $region123: #{tpu_custom_call.1} parent=5 // pred_region
        %s1522 = ssub.s32 %s27, 2
        // Predicated region
        $region125: #{tpu_custom_call.1} parent=123 // pred_check
          %p1523 = pneg %p348
        $region126: #{tpu_custom_call.1} parent=123 // pred_check_branch
          %1525 = sbr.rel (%p1523) target = $region128
        $region127: #{tpu_custom_call.1} parent=123 // pred_region
          %s1526 = sand.u32 %s333, 1
          %s1527 = scalar_lea.sflag [#allocation5], %s1526
          %s1528 = sand.u32 %s333, 1
          %s1529 = scalar_lea.vmem [#allocation18], %s1528
          %1530 = dma.done %s1527, 16
        $region128: #{tpu_custom_call.1} parent=123 // pred_fallthru
          _
      $region124: #{tpu_custom_call.1} parent=5 // pred_fallthru
        _
    $region6: #{tpu_custom_call.1} parent=1 // loop_footer
      %s31 = sadd.s32 1, %s27
    $region7: #{tpu_custom_call.1} parent=1 // loop_footer_branch
      %26 = sbr.rel target = $region3
    $region8: #{tpu_custom_call.1} parent=1 // loop_exit
      _
    %1531 = vsyncpa [#allocation4], 1
    %s1532 = scalar_lea.sflag [#allocation4], 1
    %1533 = vsyncpa %s1532, 1
    %1534 = vsyncpa [#allocation7], 1
    %1535 = vsyncpa [#allocation10], 1
    %1536 = vsyncpa [#allocation13], 1
    %1537 = vsyncpa [#allocation16], 1
    %1538 = vsyncpa [#allocation5], 1
    %s1539 = scalar_lea.sflag [#allocation5], 1
    %1540 = vsyncpa %s1539, 1

</llo_original>
